<compile_context>
chip_gen: v6e
topology: v6e:2x2x1
jax: 0.10.0
libtpu: 0.0.40
codegen_flags: <defaults>
</compile_context>

<pallas_src>
import functools

import jax
import jax.numpy as jnp
from jax.experimental import pallas as pl
from jax.experimental.pallas import tpu as pltpu


def rainbow_kernel(x_ref,
                   w1_ref, b1_ref, w2_ref, b2_ref,
                   wv1_ref, bv1_ref, wv2_ref, bv2_ref,
                   wa1_ref, ba1_ref, wa2_ref, ba2_ref,
                   out_ref, *, action_size, num_atoms):
    A, N = action_size, num_atoms

    x = x_ref[...]

    # ---- shared feature trunk: Linear->ReLU->Linear->ReLU ----
    h = jnp.dot(x, w1_ref[...], preferred_element_type=jnp.float32) + b1_ref[...]
    h = jnp.maximum(h, 0.0)
    h = jnp.dot(h, w2_ref[...], preferred_element_type=jnp.float32) + b2_ref[...]
    h = jnp.maximum(h, 0.0)

    # ---- value stream: wv2/bv2 are pre-tiled across actions, so the MXU emits the
    #      value already broadcast to the full (TB, A*N) row for free ----
    vh = jnp.dot(h, wv1_ref[...], preferred_element_type=jnp.float32) + bv1_ref[...]
    vh = jnp.maximum(vh, 0.0)
    v_t = jnp.dot(vh, wv2_ref[...], preferred_element_type=jnp.float32) + bv2_ref[...]

    # ---- advantage stream -> (TB, A*N) ----
    ah = jnp.dot(h, wa1_ref[...], preferred_element_type=jnp.float32) + ba1_ref[...]
    ah = jnp.maximum(ah, 0.0)
    a = jnp.dot(ah, wa2_ref[...], preferred_element_type=jnp.float32) + ba2_ref[...]

    # mean over actions (per atom): A-1 exact f32 adds on static lane slices, then
    # tiled back to full width so the dueling combine is one full-width pass.
    # (For large A this could be an MXU matmul against a constant averaging matrix;
    #  kept as exact VALU adds here to stay bit-close to the f32 reference.)
    adv_sum = a[:, 0:N]
    for ai in range(1, A):
        adv_sum = adv_sum + a[:, ai * N:(ai + 1) * N]
    adv_mean = adv_sum * (1.0 / A)
    adv_mean_t = jnp.concatenate([adv_mean] * A, axis=-1)          # (TB, A*N)

    # dueling combine: one full-width VALU pass over the whole row.
    q = v_t + a - adv_mean_t

    # per-action stable softmax over atoms; denominators go through the EUP
    # reciprocal (+ one Newton step for f32 accuracy) instead of a VALU divide.
    # The A results are assembled in registers and written with a single
    # lane-dense store.  (Loops unroll at trace time; A is small.)
    pieces = []
    for ai in range(A):
        qa = q[:, ai * N:(ai + 1) * N]
        qa = qa - jnp.max(qa, axis=-1, keepdims=True)
        ea = jnp.exp(qa)
        s = jnp.sum(ea, axis=-1, keepdims=True)
        r = pl.reciprocal(s, approx=True)
        r = r * (2.0 - s * r)                                      # Newton refine
        pieces.append(ea * r)
    out_ref[...] = jnp.concatenate(pieces, axis=-1)


def rainbow_forward(x, params, *, action_size, num_atoms, block_batch=128):
    """x: (B, state_size) float32. Returns q_dist: (B, action_size, num_atoms)."""
    B, S = x.shape
    A, N = action_size, num_atoms
    W = A * N

    # batch tiling: a single "parallel" grid axis.
    TB = min(block_batch, B)
    Bp = pl.cdiv(B, TB) * TB
    if Bp != B:
        x = jnp.pad(x, ((0, Bp - B), (0, 0)))
    nb = Bp // TB

    # pre-tile the value head across actions (exact column duplication).
    wv2_t = jnp.tile(params["wv2"], (1, A))
    bv2_t = jnp.tile(params["bv2"], (1, A))

    weights = (params["w1"], params["b1"], params["w2"], params["b2"],
               params["wv1"], params["bv1"], wv2_t, bv2_t,
               params["wa1"], params["ba1"], params["wa2"], params["ba2"])

    def resident(p):
        # whole weight, constant index_map -> DMA'd once, stays resident in VMEM.
        return pl.BlockSpec(p.shape, lambda i: (0,) * p.ndim)

    H = params["w1"].shape[1]
    flops = 2 * Bp * (S * H + 3 * H * H + 2 * H * W)
    bytes_accessed = 4 * (Bp * S + Bp * W + sum(int(p.size) for p in weights))
    cost = pl.CostEstimate(flops=int(flops),
                           transcendentals=int(Bp * W),
                           bytes_accessed=int(bytes_accessed))

    kernel = functools.partial(rainbow_kernel, action_size=A, num_atoms=N)

    out = pl.pallas_call(
        kernel,
        out_shape=jax.ShapeDtypeStruct((Bp, W), jnp.float32),
        grid=(nb,),
        in_specs=[pl.BlockSpec((TB, S), lambda i: (i, 0))]
                 + [resident(p) for p in weights],
        out_specs=pl.BlockSpec((TB, W), lambda i: (i, 0)),
        compiler_params=pltpu.CompilerParams(dimension_semantics=("parallel",)),
        cost_estimate=cost,
    )(x, *weights)
    return out[:B].reshape(B, A, N)


# ---------------- deterministic parameter construction (plain JAX glue) ----------------

def _uniform(key, shape, bound):
    return jax.random.uniform(key, shape, jnp.float32, -bound, bound)


def _scale_noise(key, size):
    x = jax.random.normal(key, (size,), jnp.float32)
    return jnp.sign(x) * jnp.sqrt(jnp.abs(x))


def _linear_params(key, in_f, out_f):
    kw, kb = jax.random.split(key)
    bound = 1.0 / jnp.sqrt(jnp.float32(in_f))
    w = _uniform(kw, (out_f, in_f), bound)    # PyTorch layout (out, in)
    b = _uniform(kb, (out_f,), bound)
    return w.T, b.reshape(1, out_f)           # kernel layout (in, out), (1, out)


def _noisy_linear_params(key, in_f, out_f, std_init=0.5):
    kmu_w, kmu_b, keps_in, keps_out = jax.random.split(key, 4)
    mu_range = 1.0 / jnp.sqrt(jnp.float32(in_f))
    weight_mu = _uniform(kmu_w, (out_f, in_f), mu_range)
    bias_mu = _uniform(kmu_b, (out_f,), mu_range)
    weight_sigma = jnp.full((out_f, in_f), std_init / jnp.sqrt(jnp.float32(in_f)), jnp.float32)
    bias_sigma = jnp.full((out_f,), std_init / jnp.sqrt(jnp.float32(out_f)), jnp.float32)
    eps_in = _scale_noise(keps_in, in_f)
    eps_out = _scale_noise(keps_out, out_f)
    weight_eps = jnp.outer(eps_out, eps_in)
    bias_eps = eps_out
    # training-mode effective params (mu + sigma * eps), folded ahead of the kernel
    w = weight_mu + weight_sigma * weight_eps
    b = bias_mu + bias_sigma * bias_eps
    return w.T, b.reshape(1, out_f)


def make_rainbow_params(key, state_size, action_size, num_atoms, hidden=128):
    keys = jax.random.split(key, 6)
    w1, b1 = _linear_params(keys[0], state_size, hidden)
    w2, b2 = _linear_params(keys[1], hidden, hidden)
    wv1, bv1 = _noisy_linear_params(keys[2], hidden, hidden)
    wv2, bv2 = _noisy_linear_params(keys[3], hidden, num_atoms)
    wa1, ba1 = _noisy_linear_params(keys[4], hidden, hidden)
    wa2, ba2 = _noisy_linear_params(keys[5], hidden, action_size * num_atoms)
    return dict(w1=w1, b1=b1, w2=w2, b2=b2,
                wv1=wv1, bv1=bv1, wv2=wv2, bv2=bv2,
                wa1=wa1, ba1=ba1, wa2=wa2, ba2=ba2)


def rainbow_reference(x, p, *, action_size, num_atoms):
    """Pure-JAX reference for verification."""
    h = jnp.maximum(x @ p["w1"] + p["b1"], 0.0)
    h = jnp.maximum(h @ p["w2"] + p["b2"], 0.0)
    v = jnp.maximum(h @ p["wv1"] + p["bv1"], 0.0)
    v = (v @ p["wv2"] + p["bv2"]).reshape(-1, 1, num_atoms)
    a = jnp.maximum(h @ p["wa1"] + p["ba1"], 0.0)
    a = (a @ p["wa2"] + p["ba2"]).reshape(-1, action_size, num_atoms)
    q = v + a - a.mean(axis=1, keepdims=True)
    return jax.nn.softmax(q, axis=2)


if __name__ == "__main__":
    # small shapes consistent with the module (hidden size is fixed at 128)
    batch, state_size, action_size, num_atoms = 16, 16, 4, 8
    v_min, v_max = -10.0, 10.0  # only parameterize the atom support; unused in forward

    root = jax.random.PRNGKey(0)
    kx, kp = jax.random.split(root)
    x = jax.random.normal(kx, (batch, state_size), jnp.float32)
    params = make_rainbow_params(kp, state_size, action_size, num_atoms)

    # block_batch=8 -> grid=(2,) so the batch-tiled / resident-weight path is exercised.
    q_dist = rainbow_forward(x, params, action_size=action_size,
                             num_atoms=num_atoms, block_batch=8)
    q_dist = jax.block_until_ready(q_dist)

    ref = rainbow_reference(x, params, action_size=action_size, num_atoms=num_atoms)
    assert q_dist.shape == (batch, action_size, num_atoms)
    assert jnp.allclose(q_dist, ref, atol=2e-5, rtol=2e-4)
    assert jnp.allclose(q_dist.sum(axis=-1), 1.0, atol=1e-4)

    print("KERNEL_OK")
</pallas_src>

<mosaic_0001>
module attributes {stable_mosaic.version = 11 : i64} {
  func.func @rainbow_kernel(%arg0: i32, %arg1: memref<8x16xf32, #tpu.memory_space<vmem>>, %arg2: memref<16x128xf32, #tpu.memory_space<vmem>>, %arg3: memref<1x128xf32, #tpu.memory_space<vmem>>, %arg4: memref<128x128xf32, #tpu.memory_space<vmem>>, %arg5: memref<1x128xf32, #tpu.memory_space<vmem>>, %arg6: memref<128x128xf32, #tpu.memory_space<vmem>>, %arg7: memref<1x128xf32, #tpu.memory_space<vmem>>, %arg8: memref<128x32xf32, #tpu.memory_space<vmem>>, %arg9: memref<1x32xf32, #tpu.memory_space<vmem>>, %arg10: memref<128x128xf32, #tpu.memory_space<vmem>>, %arg11: memref<1x128xf32, #tpu.memory_space<vmem>>, %arg12: memref<128x32xf32, #tpu.memory_space<vmem>>, %arg13: memref<1x32xf32, #tpu.memory_space<vmem>>, %arg14: memref<8x32xf32, #tpu.memory_space<vmem>>) attributes {dimension_semantics = [#tpu.dimension_semantics<parallel>], iteration_bounds = array<i64: 2>, scalar_prefetch = 0 : i64, scratch_operands = 0 : i64, tpu.core_type = #tpu.core_type<tc>, window_params = [{transform_indices = @transform_0, window_bounds = array<i64: 8, 16>}, {pipeline_mode = #tpu.pipeline_mode<synchronous>, transform_indices = @transform_1, window_bounds = array<i64: 16, 128>}, {pipeline_mode = #tpu.pipeline_mode<synchronous>, transform_indices = @transform_2, window_bounds = array<i64: 1, 128>}, {pipeline_mode = #tpu.pipeline_mode<synchronous>, transform_indices = @transform_3, window_bounds = array<i64: 128, 128>}, {pipeline_mode = #tpu.pipeline_mode<synchronous>, transform_indices = @transform_4, window_bounds = array<i64: 1, 128>}, {pipeline_mode = #tpu.pipeline_mode<synchronous>, transform_indices = @transform_5, window_bounds = array<i64: 128, 128>}, {pipeline_mode = #tpu.pipeline_mode<synchronous>, transform_indices = @transform_6, window_bounds = array<i64: 1, 128>}, {pipeline_mode = #tpu.pipeline_mode<synchronous>, transform_indices = @transform_7, window_bounds = array<i64: 128, 32>}, {pipeline_mode = #tpu.pipeline_mode<synchronous>, transform_indices = @transform_8, window_bounds = array<i64: 1, 32>}, {pipeline_mode = #tpu.pipeline_mode<synchronous>, transform_indices = @transform_9, window_bounds = array<i64: 128, 128>}, {pipeline_mode = #tpu.pipeline_mode<synchronous>, transform_indices = @transform_10, window_bounds = array<i64: 1, 128>}, {pipeline_mode = #tpu.pipeline_mode<synchronous>, transform_indices = @transform_11, window_bounds = array<i64: 128, 32>}, {pipeline_mode = #tpu.pipeline_mode<synchronous>, transform_indices = @transform_12, window_bounds = array<i64: 1, 32>}, {transform_indices = @transform_13, window_bounds = array<i64: 8, 32>}]} {
    %c0 = arith.constant 0 : index
    %c0_0 = arith.constant 0 : index
    %0 = vector.load %arg1[%c0, %c0_0] : memref<8x16xf32, #tpu.memory_space<vmem>>, vector<8x16xf32>
    %c0_1 = arith.constant 0 : index
    %c0_2 = arith.constant 0 : index
    %1 = vector.load %arg2[%c0_1, %c0_2] : memref<16x128xf32, #tpu.memory_space<vmem>>, vector<16x128xf32>
    %cst = arith.constant dense<0.000000e+00> : vector<8x128xf32>
    %2 = tpu.matmul %0, %1, %cst {dimension_numbers = #tpu.dot_dimension_numbers<[1], [0], [0], [1], [0, 0, 1, 1], [], []>} : vector<8x16xf32>, vector<16x128xf32>, vector<8x128xf32> -> vector<8x128xf32>
    %c0_3 = arith.constant 0 : index
    %c0_4 = arith.constant 0 : index
    %3 = vector.load %arg3[%c0_3, %c0_4] : memref<1x128xf32, #tpu.memory_space<vmem>>, vector<1x128xf32>
    %4 = vector.broadcast %3 : vector<1x128xf32> to vector<8x128xf32>
    %5 = arith.addf %2, %4 : vector<8x128xf32>
    %cst_5 = arith.constant 0.000000e+00 : f32
    %6 = vector.broadcast %cst_5 : f32 to vector<8x128xf32>
    %7 = arith.maximumf %5, %6 : vector<8x128xf32>
    %c0_6 = arith.constant 0 : index
    %c0_7 = arith.constant 0 : index
    %8 = vector.load %arg4[%c0_6, %c0_7] : memref<128x128xf32, #tpu.memory_space<vmem>>, vector<128x128xf32>
    %cst_8 = arith.constant dense<0.000000e+00> : vector<8x128xf32>
    %9 = tpu.matmul %7, %8, %cst_8 {dimension_numbers = #tpu.dot_dimension_numbers<[1], [0], [0], [1], [0, 0, 1, 1], [], []>} : vector<8x128xf32>, vector<128x128xf32>, vector<8x128xf32> -> vector<8x128xf32>
    %c0_9 = arith.constant 0 : index
    %c0_10 = arith.constant 0 : index
    %10 = vector.load %arg5[%c0_9, %c0_10] : memref<1x128xf32, #tpu.memory_space<vmem>>, vector<1x128xf32>
    %11 = vector.broadcast %10 : vector<1x128xf32> to vector<8x128xf32>
    %12 = arith.addf %9, %11 : vector<8x128xf32>
    %cst_11 = arith.constant 0.000000e+00 : f32
    %13 = vector.broadcast %cst_11 : f32 to vector<8x128xf32>
    %14 = arith.maximumf %12, %13 : vector<8x128xf32>
    %c0_12 = arith.constant 0 : index
    %c0_13 = arith.constant 0 : index
    %15 = vector.load %arg6[%c0_12, %c0_13] : memref<128x128xf32, #tpu.memory_space<vmem>>, vector<128x128xf32>
    %cst_14 = arith.constant dense<0.000000e+00> : vector<8x128xf32>
    %16 = tpu.matmul %14, %15, %cst_14 {dimension_numbers = #tpu.dot_dimension_numbers<[1], [0], [0], [1], [0, 0, 1, 1], [], []>} : vector<8x128xf32>, vector<128x128xf32>, vector<8x128xf32> -> vector<8x128xf32>
    %c0_15 = arith.constant 0 : index
    %c0_16 = arith.constant 0 : index
    %17 = vector.load %arg7[%c0_15, %c0_16] : memref<1x128xf32, #tpu.memory_space<vmem>>, vector<1x128xf32>
    %18 = vector.broadcast %17 : vector<1x128xf32> to vector<8x128xf32>
    %19 = arith.addf %16, %18 : vector<8x128xf32>
    %cst_17 = arith.constant 0.000000e+00 : f32
    %20 = vector.broadcast %cst_17 : f32 to vector<8x128xf32>
    %21 = arith.maximumf %19, %20 : vector<8x128xf32>
    %c0_18 = arith.constant 0 : index
    %c0_19 = arith.constant 0 : index
    %22 = vector.load %arg8[%c0_18, %c0_19] : memref<128x32xf32, #tpu.memory_space<vmem>>, vector<128x32xf32>
    %cst_20 = arith.constant dense<0.000000e+00> : vector<8x32xf32>
    %23 = tpu.matmul %21, %22, %cst_20 {dimension_numbers = #tpu.dot_dimension_numbers<[1], [0], [0], [1], [0, 0, 1, 1], [], []>} : vector<8x128xf32>, vector<128x32xf32>, vector<8x32xf32> -> vector<8x32xf32>
    %c0_21 = arith.constant 0 : index
    %c0_22 = arith.constant 0 : index
    %24 = vector.load %arg9[%c0_21, %c0_22] : memref<1x32xf32, #tpu.memory_space<vmem>>, vector<1x32xf32>
    %25 = vector.broadcast %24 : vector<1x32xf32> to vector<8x32xf32>
    %26 = arith.addf %23, %25 : vector<8x32xf32>
    %c0_23 = arith.constant 0 : index
    %c0_24 = arith.constant 0 : index
    %27 = vector.load %arg10[%c0_23, %c0_24] : memref<128x128xf32, #tpu.memory_space<vmem>>, vector<128x128xf32>
    %cst_25 = arith.constant dense<0.000000e+00> : vector<8x128xf32>
    %28 = tpu.matmul %14, %27, %cst_25 {dimension_numbers = #tpu.dot_dimension_numbers<[1], [0], [0], [1], [0, 0, 1, 1], [], []>} : vector<8x128xf32>, vector<128x128xf32>, vector<8x128xf32> -> vector<8x128xf32>
    %c0_26 = arith.constant 0 : index
    %c0_27 = arith.constant 0 : index
    %29 = vector.load %arg11[%c0_26, %c0_27] : memref<1x128xf32, #tpu.memory_space<vmem>>, vector<1x128xf32>
    %30 = vector.broadcast %29 : vector<1x128xf32> to vector<8x128xf32>
    %31 = arith.addf %28, %30 : vector<8x128xf32>
    %cst_28 = arith.constant 0.000000e+00 : f32
    %32 = vector.broadcast %cst_28 : f32 to vector<8x128xf32>
    %33 = arith.maximumf %31, %32 : vector<8x128xf32>
    %c0_29 = arith.constant 0 : index
    %c0_30 = arith.constant 0 : index
    %34 = vector.load %arg12[%c0_29, %c0_30] : memref<128x32xf32, #tpu.memory_space<vmem>>, vector<128x32xf32>
    %cst_31 = arith.constant dense<0.000000e+00> : vector<8x32xf32>
    %35 = tpu.matmul %33, %34, %cst_31 {dimension_numbers = #tpu.dot_dimension_numbers<[1], [0], [0], [1], [0, 0, 1, 1], [], []>} : vector<8x128xf32>, vector<128x32xf32>, vector<8x32xf32> -> vector<8x32xf32>
    %c0_32 = arith.constant 0 : index
    %c0_33 = arith.constant 0 : index
    %36 = vector.load %arg13[%c0_32, %c0_33] : memref<1x32xf32, #tpu.memory_space<vmem>>, vector<1x32xf32>
    %37 = vector.broadcast %36 : vector<1x32xf32> to vector<8x32xf32>
    %38 = arith.addf %35, %37 : vector<8x32xf32>
    %39 = vector.extract_strided_slice %38 {offsets = [0, 0], sizes = [8, 8], strides = [1, 1]} : vector<8x32xf32> to vector<8x8xf32>
    %40 = vector.extract_strided_slice %38 {offsets = [0, 8], sizes = [8, 8], strides = [1, 1]} : vector<8x32xf32> to vector<8x8xf32>
    %41 = arith.addf %39, %40 : vector<8x8xf32>
    %42 = vector.extract_strided_slice %38 {offsets = [0, 16], sizes = [8, 8], strides = [1, 1]} : vector<8x32xf32> to vector<8x8xf32>
    %43 = arith.addf %41, %42 : vector<8x8xf32>
    %44 = vector.extract_strided_slice %38 {offsets = [0, 24], sizes = [8, 8], strides = [1, 1]} : vector<8x32xf32> to vector<8x8xf32>
    %45 = arith.addf %43, %44 : vector<8x8xf32>
    %cst_34 = arith.constant 2.500000e-01 : f32
    %46 = vector.broadcast %cst_34 : f32 to vector<8x8xf32>
    %47 = arith.mulf %45, %46 : vector<8x8xf32>
    %48 = tpu.concatenate %47, %47, %47, %47 in 1 : vector<8x8xf32>, vector<8x8xf32>, vector<8x8xf32>, vector<8x8xf32> -> vector<8x32xf32>
    %49 = arith.addf %26, %38 : vector<8x32xf32>
    %50 = arith.subf %49, %48 : vector<8x32xf32>
    %51 = vector.extract_strided_slice %50 {offsets = [0, 0], sizes = [8, 8], strides = [1, 1]} : vector<8x32xf32> to vector<8x8xf32>
    %cst_35 = arith.constant dense<0xFF800000> : vector<8xf32>
    %52 = vector.multi_reduction <maximumf>, %51, %cst_35 [1] : vector<8x8xf32> to vector<8xf32>
    %53 = vector.shape_cast %52 : vector<8xf32> to vector<8x1xf32>
    %54 = vector.broadcast %53 : vector<8x1xf32> to vector<8x8xf32>
    %55 = arith.subf %51, %54 : vector<8x8xf32>
    %56 = math.exp %55 : vector<8x8xf32>
    %cst_36 = arith.constant dense<0.000000e+00> : vector<8xf32>
    %57 = vector.multi_reduction <add>, %56, %cst_36 [1] : vector<8x8xf32> to vector<8xf32>
    %58 = vector.shape_cast %57 : vector<8xf32> to vector<8x1xf32>
    %59 = tpu.reciprocal %58 {approx = true} : vector<8x1xf32> -> vector<8x1xf32>
    %60 = arith.mulf %58, %59 : vector<8x1xf32>
    %cst_37 = arith.constant 2.000000e+00 : f32
    %61 = vector.broadcast %cst_37 : f32 to vector<8x1xf32>
    %62 = arith.subf %61, %60 : vector<8x1xf32>
    %63 = arith.mulf %59, %62 : vector<8x1xf32>
    %64 = vector.broadcast %63 : vector<8x1xf32> to vector<8x8xf32>
    %65 = arith.mulf %56, %64 : vector<8x8xf32>
    %66 = vector.extract_strided_slice %50 {offsets = [0, 8], sizes = [8, 8], strides = [1, 1]} : vector<8x32xf32> to vector<8x8xf32>
    %cst_38 = arith.constant dense<0xFF800000> : vector<8xf32>
    %67 = vector.multi_reduction <maximumf>, %66, %cst_38 [1] : vector<8x8xf32> to vector<8xf32>
    %68 = vector.shape_cast %67 : vector<8xf32> to vector<8x1xf32>
    %69 = vector.broadcast %68 : vector<8x1xf32> to vector<8x8xf32>
    %70 = arith.subf %66, %69 : vector<8x8xf32>
    %71 = math.exp %70 : vector<8x8xf32>
    %cst_39 = arith.constant dense<0.000000e+00> : vector<8xf32>
    %72 = vector.multi_reduction <add>, %71, %cst_39 [1] : vector<8x8xf32> to vector<8xf32>
    %73 = vector.shape_cast %72 : vector<8xf32> to vector<8x1xf32>
    %74 = tpu.reciprocal %73 {approx = true} : vector<8x1xf32> -> vector<8x1xf32>
    %75 = arith.mulf %73, %74 : vector<8x1xf32>
    %cst_40 = arith.constant 2.000000e+00 : f32
    %76 = vector.broadcast %cst_40 : f32 to vector<8x1xf32>
    %77 = arith.subf %76, %75 : vector<8x1xf32>
    %78 = arith.mulf %74, %77 : vector<8x1xf32>
    %79 = vector.broadcast %78 : vector<8x1xf32> to vector<8x8xf32>
    %80 = arith.mulf %71, %79 : vector<8x8xf32>
    %81 = vector.extract_strided_slice %50 {offsets = [0, 16], sizes = [8, 8], strides = [1, 1]} : vector<8x32xf32> to vector<8x8xf32>
    %cst_41 = arith.constant dense<0xFF800000> : vector<8xf32>
    %82 = vector.multi_reduction <maximumf>, %81, %cst_41 [1] : vector<8x8xf32> to vector<8xf32>
    %83 = vector.shape_cast %82 : vector<8xf32> to vector<8x1xf32>
    %84 = vector.broadcast %83 : vector<8x1xf32> to vector<8x8xf32>
    %85 = arith.subf %81, %84 : vector<8x8xf32>
    %86 = math.exp %85 : vector<8x8xf32>
    %cst_42 = arith.constant dense<0.000000e+00> : vector<8xf32>
    %87 = vector.multi_reduction <add>, %86, %cst_42 [1] : vector<8x8xf32> to vector<8xf32>
    %88 = vector.shape_cast %87 : vector<8xf32> to vector<8x1xf32>
    %89 = tpu.reciprocal %88 {approx = true} : vector<8x1xf32> -> vector<8x1xf32>
    %90 = arith.mulf %88, %89 : vector<8x1xf32>
    %cst_43 = arith.constant 2.000000e+00 : f32
    %91 = vector.broadcast %cst_43 : f32 to vector<8x1xf32>
    %92 = arith.subf %91, %90 : vector<8x1xf32>
    %93 = arith.mulf %89, %92 : vector<8x1xf32>
    %94 = vector.broadcast %93 : vector<8x1xf32> to vector<8x8xf32>
    %95 = arith.mulf %86, %94 : vector<8x8xf32>
    %96 = vector.extract_strided_slice %50 {offsets = [0, 24], sizes = [8, 8], strides = [1, 1]} : vector<8x32xf32> to vector<8x8xf32>
    %cst_44 = arith.constant dense<0xFF800000> : vector<8xf32>
    %97 = vector.multi_reduction <maximumf>, %96, %cst_44 [1] : vector<8x8xf32> to vector<8xf32>
    %98 = vector.shape_cast %97 : vector<8xf32> to vector<8x1xf32>
    %99 = vector.broadcast %98 : vector<8x1xf32> to vector<8x8xf32>
    %100 = arith.subf %96, %99 : vector<8x8xf32>
    %101 = math.exp %100 : vector<8x8xf32>
    %cst_45 = arith.constant dense<0.000000e+00> : vector<8xf32>
    %102 = vector.multi_reduction <add>, %101, %cst_45 [1] : vector<8x8xf32> to vector<8xf32>
    %103 = vector.shape_cast %102 : vector<8xf32> to vector<8x1xf32>
    %104 = tpu.reciprocal %103 {approx = true} : vector<8x1xf32> -> vector<8x1xf32>
    %105 = arith.mulf %103, %104 : vector<8x1xf32>
    %cst_46 = arith.constant 2.000000e+00 : f32
    %106 = vector.broadcast %cst_46 : f32 to vector<8x1xf32>
    %107 = arith.subf %106, %105 : vector<8x1xf32>
    %108 = arith.mulf %104, %107 : vector<8x1xf32>
    %109 = vector.broadcast %108 : vector<8x1xf32> to vector<8x8xf32>
    %110 = arith.mulf %101, %109 : vector<8x8xf32>
    %111 = tpu.concatenate %65, %80, %95, %110 in 1 : vector<8x8xf32>, vector<8x8xf32>, vector<8x8xf32>, vector<8x8xf32> -> vector<8x32xf32>
    %c0_47 = arith.constant 0 : index
    %c0_48 = arith.constant 0 : index
    %112 = vector.load %arg14[%c0_47, %c0_48] : memref<8x32xf32, #tpu.memory_space<vmem>>, vector<8x32xf32>
    tpu.vector_store %arg14[%c0_47, %c0_48], %111 {strides = array<i32>} : memref<8x32xf32, #tpu.memory_space<vmem>>, vector<8x32xf32>,
    return
  }
  func.func @transform_0(%arg0: i32) -> (i32, i32) {
    %c0_i32 = arith.constant 0 : i32
    %c0_i32_0 = arith.constant 0 : i32
    return %arg0, %c0_i32 : i32, i32
  }
  func.func @transform_1(%arg0: i32) -> (i32, i32) {
    %c0_i32 = arith.constant 0 : i32
    %c0_i32_0 = arith.constant 0 : i32
    %c0_i32_1 = arith.constant 0 : i32
    return %c0_i32, %c0_i32_0 : i32, i32
  }
  func.func @transform_2(%arg0: i32) -> (i32, i32) {
    %c0_i32 = arith.constant 0 : i32
    %c0_i32_0 = arith.constant 0 : i32
    %c0_i32_1 = arith.constant 0 : i32
    return %c0_i32, %c0_i32_0 : i32, i32
  }
  func.func @transform_3(%arg0: i32) -> (i32, i32) {
    %c0_i32 = arith.constant 0 : i32
    %c0_i32_0 = arith.constant 0 : i32
    %c0_i32_1 = arith.constant 0 : i32
    return %c0_i32, %c0_i32_0 : i32, i32
  }
  func.func @transform_4(%arg0: i32) -> (i32, i32) {
    %c0_i32 = arith.constant 0 : i32
    %c0_i32_0 = arith.constant 0 : i32
    %c0_i32_1 = arith.constant 0 : i32
    return %c0_i32, %c0_i32_0 : i32, i32
  }
  func.func @transform_5(%arg0: i32) -> (i32, i32) {
    %c0_i32 = arith.constant 0 : i32
    %c0_i32_0 = arith.constant 0 : i32
    %c0_i32_1 = arith.constant 0 : i32
    return %c0_i32, %c0_i32_0 : i32, i32
  }
  func.func @transform_6(%arg0: i32) -> (i32, i32) {
    %c0_i32 = arith.constant 0 : i32
    %c0_i32_0 = arith.constant 0 : i32
    %c0_i32_1 = arith.constant 0 : i32
    return %c0_i32, %c0_i32_0 : i32, i32
  }
  func.func @transform_7(%arg0: i32) -> (i32, i32) {
    %c0_i32 = arith.constant 0 : i32
    %c0_i32_0 = arith.constant 0 : i32
    %c0_i32_1 = arith.constant 0 : i32
    return %c0_i32, %c0_i32_0 : i32, i32
  }
  func.func @transform_8(%arg0: i32) -> (i32, i32) {
    %c0_i32 = arith.constant 0 : i32
    %c0_i32_0 = arith.constant 0 : i32
    %c0_i32_1 = arith.constant 0 : i32
    return %c0_i32, %c0_i32_0 : i32, i32
  }
  func.func @transform_9(%arg0: i32) -> (i32, i32) {
    %c0_i32 = arith.constant 0 : i32
    %c0_i32_0 = arith.constant 0 : i32
    %c0_i32_1 = arith.constant 0 : i32
    return %c0_i32, %c0_i32_0 : i32, i32
  }
  func.func @transform_10(%arg0: i32) -> (i32, i32) {
    %c0_i32 = arith.constant 0 : i32
    %c0_i32_0 = arith.constant 0 : i32
    %c0_i32_1 = arith.constant 0 : i32
    return %c0_i32, %c0_i32_0 : i32, i32
  }
  func.func @transform_11(%arg0: i32) -> (i32, i32) {
    %c0_i32 = arith.constant 0 : i32
    %c0_i32_0 = arith.constant 0 : i32
    %c0_i32_1 = arith.constant 0 : i32
    return %c0_i32, %c0_i32_0 : i32, i32
  }
  func.func @transform_12(%arg0: i32) -> (i32, i32) {
    %c0_i32 = arith.constant 0 : i32
    %c0_i32_0 = arith.constant 0 : i32
    %c0_i32_1 = arith.constant 0 : i32
    return %c0_i32, %c0_i32_0 : i32, i32
  }
  func.func @transform_13(%arg0: i32) -> (i32, i32) {
    %c0_i32 = arith.constant 0 : i32
    %c0_i32_0 = arith.constant 0 : i32
    return %arg0, %c0_i32 : i32, i32
  }
}

</mosaic_0001>

<llo_original>
// kernel: tpu_custom_call.1
$region0: #{tpu_custom_call.1}
  #allocation0 [shape = 'u32[]', space=smem, size = 0x4, offset = 0x4, fixed_abs, tag = 'smem constant byte address 0x4 - core index']
  #allocation1 [shape = 'u32[144,128]{1,0:T(1,128)}', space=vmem, size = 0x12000, scoped, tag = 'internal scratch']
  %s0 = inlined_call_operand.vmem [shape: f32[16,16], index: 0, kind: input, shape index: {}]
  %s1 = inlined_call_operand.vmem [shape: f32[16,128], index: 1, kind: input, shape index: {}]
  %s2 = inlined_call_operand.vmem [shape: f32[1,128], index: 2, kind: input, shape index: {}]
  %s3 = inlined_call_operand.vmem [shape: f32[128,128], index: 3, kind: input, shape index: {}]
  %s4 = inlined_call_operand.vmem [shape: f32[1,128], index: 4, kind: input, shape index: {}]
  %s5 = inlined_call_operand.vmem [shape: f32[128,128], index: 5, kind: input, shape index: {}]
  %s6 = inlined_call_operand.vmem [shape: f32[1,128], index: 6, kind: input, shape index: {}]
  %s7 = inlined_call_operand.vmem [shape: f32[128,32], index: 7, kind: input, shape index: {}]
  %s8 = inlined_call_operand.vmem [shape: f32[1,32], index: 8, kind: input, shape index: {}]
  %s9 = inlined_call_operand.hbm [shape: f32[128,128], index: 9, kind: input, shape index: {}]
  %s10 = inlined_call_operand.vmem [shape: f32[1,128], index: 10, kind: input, shape index: {}]
  %s11 = inlined_call_operand.vmem [shape: f32[128,32], index: 11, kind: input, shape index: {}]
  %s12 = inlined_call_operand.vmem [shape: f32[1,32], index: 12, kind: input, shape index: {}]
  %s13 = inlined_call_operand.hbm [shape: f32[16,32], index: 13, kind: output, shape index: {}]
  %s14 = sld [smem:[#allocation0]]
  $region89: #{tpu_custom_call.1} parent=0
    _
  %s16 = ssub.s32 1, %s14
  %s17 = scalar_select 0, %s16, %s14
  $region1: #{tpu_custom_call.1} parent=0
    #allocation2 [shape = 'u8[65536]{0}', space=vmem, size = 0x10000, scoped, tag = 'input window, operand 9, single buffered']
    #allocation3 [shape = 's32[2]{0}', space=sflag, size = 0x8, scoped, tag = 'scoped memory for tpu_custom_call.1']
    #allocation4 [shape = 's32[2]{0}', space=sflag, size = 0x8, scoped, tag = 'scoped memory for tpu_custom_call.1']
    #allocation5 [shape = 'u8[8192]{0}', space=vmem, size = 0x2000, scoped, tag = 'output window, operand 0']
    %18 = vsyncpa [#allocation3], 0
    %19 = vsyncpa [#allocation4], 0
    %s20 = scalar_lea.sflag [#allocation4], 1
    %21 = vsyncpa %s20, 0
    loop: start=0, step=1, limit=4
    $region2: #{tpu_custom_call.1} parent=1 // loop_pre_header
      _
    $region3: #{tpu_custom_call.1} parent=1 // loop_header
      %s23 = sphi 0, %s27
      %p24 = scmp.ge.s32.totalorder %s23, 4
      %s33 = sphi 0, %s35
      %s36 = sphi 0, %s33
      %s37 = sphi 0, %s36
      %s53 = sphi 0, %s37
      %s57 = sphi 0, %s57
      %s59 = sphi 0, %s57
      %s60 = sphi 0, %s59
      %s74 = sphi 0, %s60
      %s78 = sphi 0, %s78
      %s80 = sphi 0, %s78
      %s81 = sphi 0, %s80
      %s95 = sphi 0, %s81
      %s99 = sphi 0, %s99
      %s101 = sphi 0, %s99
      %s102 = sphi 0, %s101
      %s116 = sphi 0, %s102
      %s120 = sphi 0, %s120
      %s122 = sphi 0, %s120
      %s123 = sphi 0, %s122
      %s137 = sphi 0, %s123
      %s141 = sphi 0, %s141
      %s143 = sphi 0, %s141
      %s144 = sphi 0, %s143
      %s158 = sphi 0, %s144
      %s162 = sphi 0, %s162
      %s164 = sphi 0, %s162
      %s165 = sphi 0, %s164
      %s179 = sphi 0, %s165
      %s183 = sphi 0, %s183
      %s185 = sphi 0, %s183
      %s186 = sphi 0, %s185
      %s200 = sphi 0, %s186
      %s204 = sphi 0, %s204
      %s206 = sphi 0, %s204
      %s207 = sphi 0, %s206
      %s221 = sphi 0, %s207
      %s225 = sphi 0, %s225
      %s227 = sphi 0, %s225
      %s228 = sphi 0, %s227
      %s242 = sphi 0, %s228
      %s246 = sphi 0, %s246
      %s248 = sphi 0, %s246
      %s249 = sphi 0, %s248
      %s263 = sphi 0, %s249
      %s267 = sphi 0, %s267
      %s269 = sphi 0, %s267
      %s270 = sphi 0, %s269
      %s284 = sphi 0, %s270
      %s288 = sphi 0, %s288
      %s290 = sphi 0, %s288
      %s291 = sphi 0, %s290
      %s305 = sphi 0, %s291
      %s311 = sphi 0, %s313
      %s314 = sphi 0, %s311
      %s315 = sphi 0, %s314
      %s331 = sphi 0, %s315
    $region4: #{tpu_custom_call.1} parent=1 // loop_header_branch
      %26 = sbr.rel (%p24) target = $region8
    $region5: #{tpu_custom_call.1} parent=1 // loop_body
      %s28 = ssub.s32 %s23, 1
      %s29 = ssub.s32 %s23, 2
      %s30 = sadd.s32 %s23, 1
      %s31 = ssub.s32 %s23, %s30
      %p32 = scmp.eq.s32.totalorder %s31, 0
      %s34 = sadd.s32 %s33, 1
      %s35 = scalar_select %p32, %s33, %s34
      %p38 = pneg %p32
      %p39 = scmp.eq.s32.totalorder %s23, 1
      %p40 = por %p38, %p39
      %p41 = scmp.ne.s32.totalorder %s33, %s36
      %p42 = scmp.eq.s32.totalorder %s23, 0
      %p43 = por %p41, %p42
      %p44 = scmp.ne.s32.totalorder %s33, %s36
      %p45 = scmp.eq.s32.totalorder %s28, 1
      %p46 = por %p44, %p45
      %p47 = scmp.ne.s32.totalorder %s36, %s37
      %p48 = scmp.eq.s32.totalorder %s28, 0
      %p49 = por %p47, %p48
      %p50 = scmp.ne.s32.totalorder %s36, %s37
      %p51 = scmp.eq.s32.totalorder %s29, 1
      %p52 = por %p50, %p51
      %p54 = scmp.ne.s32.totalorder %s37, %s53
      %p55 = scmp.eq.s32.totalorder %s29, 0
      %p56 = por %p54, %p55
      %s58 = sadd.s32 %s57, 1
      %p61 = scmp.eq.s32.totalorder %s23, 1
      %p62 = scmp.ne.s32.totalorder %s57, %s59
      %p63 = scmp.eq.s32.totalorder %s23, 0
      %p64 = por %p62, %p63
      %p65 = scmp.ne.s32.totalorder %s57, %s59
      %p66 = scmp.eq.s32.totalorder %s28, 1
      %p67 = por %p65, %p66
      %p68 = scmp.ne.s32.totalorder %s59, %s60
      %p69 = scmp.eq.s32.totalorder %s28, 0
      %p70 = por %p68, %p69
      %p71 = scmp.ne.s32.totalorder %s59, %s60
      %p72 = scmp.eq.s32.totalorder %s29, 1
      %p73 = por %p71, %p72
      %p75 = scmp.ne.s32.totalorder %s60, %s74
      %p76 = scmp.eq.s32.totalorder %s29, 0
      %p77 = por %p75, %p76
      %s79 = sadd.s32 %s78, 1
      %p82 = scmp.eq.s32.totalorder %s23, 1
      %p83 = scmp.ne.s32.totalorder %s78, %s80
      %p84 = scmp.eq.s32.totalorder %s23, 0
      %p85 = por %p83, %p84
      %p86 = scmp.ne.s32.totalorder %s78, %s80
      %p87 = scmp.eq.s32.totalorder %s28, 1
      %p88 = por %p86, %p87
      %p89 = scmp.ne.s32.totalorder %s80, %s81
      %p90 = scmp.eq.s32.totalorder %s28, 0
      %p91 = por %p89, %p90
      %p92 = scmp.ne.s32.totalorder %s80, %s81
      %p93 = scmp.eq.s32.totalorder %s29, 1
      %p94 = por %p92, %p93
      %p96 = scmp.ne.s32.totalorder %s81, %s95
      %p97 = scmp.eq.s32.totalorder %s29, 0
      %p98 = por %p96, %p97
      %s100 = sadd.s32 %s99, 1
      %p103 = scmp.eq.s32.totalorder %s23, 1
      %p104 = scmp.ne.s32.totalorder %s99, %s101
      %p105 = scmp.eq.s32.totalorder %s23, 0
      %p106 = por %p104, %p105
      %p107 = scmp.ne.s32.totalorder %s99, %s101
      %p108 = scmp.eq.s32.totalorder %s28, 1
      %p109 = por %p107, %p108
      %p110 = scmp.ne.s32.totalorder %s101, %s102
      %p111 = scmp.eq.s32.totalorder %s28, 0
      %p112 = por %p110, %p111
      %p113 = scmp.ne.s32.totalorder %s101, %s102
      %p114 = scmp.eq.s32.totalorder %s29, 1
      %p115 = por %p113, %p114
      %p117 = scmp.ne.s32.totalorder %s102, %s116
      %p118 = scmp.eq.s32.totalorder %s29, 0
      %p119 = por %p117, %p118
      %s121 = sadd.s32 %s120, 1
      %p124 = scmp.eq.s32.totalorder %s23, 1
      %p125 = scmp.ne.s32.totalorder %s120, %s122
      %p126 = scmp.eq.s32.totalorder %s23, 0
      %p127 = por %p125, %p126
      %p128 = scmp.ne.s32.totalorder %s120, %s122
      %p129 = scmp.eq.s32.totalorder %s28, 1
      %p130 = por %p128, %p129
      %p131 = scmp.ne.s32.totalorder %s122, %s123
      %p132 = scmp.eq.s32.totalorder %s28, 0
      %p133 = por %p131, %p132
      %p134 = scmp.ne.s32.totalorder %s122, %s123
      %p135 = scmp.eq.s32.totalorder %s29, 1
      %p136 = por %p134, %p135
      %p138 = scmp.ne.s32.totalorder %s123, %s137
      %p139 = scmp.eq.s32.totalorder %s29, 0
      %p140 = por %p138, %p139
      %s142 = sadd.s32 %s141, 1
      %p145 = scmp.eq.s32.totalorder %s23, 1
      %p146 = scmp.ne.s32.totalorder %s141, %s143
      %p147 = scmp.eq.s32.totalorder %s23, 0
      %p148 = por %p146, %p147
      %p149 = scmp.ne.s32.totalorder %s141, %s143
      %p150 = scmp.eq.s32.totalorder %s28, 1
      %p151 = por %p149, %p150
      %p152 = scmp.ne.s32.totalorder %s143, %s144
      %p153 = scmp.eq.s32.totalorder %s28, 0
      %p154 = por %p152, %p153
      %p155 = scmp.ne.s32.totalorder %s143, %s144
      %p156 = scmp.eq.s32.totalorder %s29, 1
      %p157 = por %p155, %p156
      %p159 = scmp.ne.s32.totalorder %s144, %s158
      %p160 = scmp.eq.s32.totalorder %s29, 0
      %p161 = por %p159, %p160
      %s163 = sadd.s32 %s162, 1
      %p166 = scmp.eq.s32.totalorder %s23, 1
      %p167 = scmp.ne.s32.totalorder %s162, %s164
      %p168 = scmp.eq.s32.totalorder %s23, 0
      %p169 = por %p167, %p168
      %p170 = scmp.ne.s32.totalorder %s162, %s164
      %p171 = scmp.eq.s32.totalorder %s28, 1
      %p172 = por %p170, %p171
      %p173 = scmp.ne.s32.totalorder %s164, %s165
      %p174 = scmp.eq.s32.totalorder %s28, 0
      %p175 = por %p173, %p174
      %p176 = scmp.ne.s32.totalorder %s164, %s165
      %p177 = scmp.eq.s32.totalorder %s29, 1
      %p178 = por %p176, %p177
      %p180 = scmp.ne.s32.totalorder %s165, %s179
      %p181 = scmp.eq.s32.totalorder %s29, 0
      %p182 = por %p180, %p181
      %s184 = sadd.s32 %s183, 1
      %p187 = scmp.eq.s32.totalorder %s23, 1
      %p188 = scmp.ne.s32.totalorder %s183, %s185
      %p189 = scmp.eq.s32.totalorder %s23, 0
      %p190 = por %p188, %p189
      %p191 = scmp.ne.s32.totalorder %s183, %s185
      %p192 = scmp.eq.s32.totalorder %s28, 1
      %p193 = por %p191, %p192
      %p194 = scmp.ne.s32.totalorder %s185, %s186
      %p195 = scmp.eq.s32.totalorder %s28, 0
      %p196 = por %p194, %p195
      %p197 = scmp.ne.s32.totalorder %s185, %s186
      %p198 = scmp.eq.s32.totalorder %s29, 1
      %p199 = por %p197, %p198
      %p201 = scmp.ne.s32.totalorder %s186, %s200
      %p202 = scmp.eq.s32.totalorder %s29, 0
      %p203 = por %p201, %p202
      %s205 = sadd.s32 %s204, 1
      %p208 = scmp.eq.s32.totalorder %s23, 1
      %p209 = scmp.ne.s32.totalorder %s204, %s206
      %p210 = scmp.eq.s32.totalorder %s23, 0
      %p211 = por %p209, %p210
      %p212 = scmp.ne.s32.totalorder %s204, %s206
      %p213 = scmp.eq.s32.totalorder %s28, 1
      %p214 = por %p212, %p213
      %p215 = scmp.ne.s32.totalorder %s206, %s207
      %p216 = scmp.eq.s32.totalorder %s28, 0
      %p217 = por %p215, %p216
      %p218 = scmp.ne.s32.totalorder %s206, %s207
      %p219 = scmp.eq.s32.totalorder %s29, 1
      %p220 = por %p218, %p219
      %p222 = scmp.ne.s32.totalorder %s207, %s221
      %p223 = scmp.eq.s32.totalorder %s29, 0
      %p224 = por %p222, %p223
      %s226 = sadd.s32 %s225, 1
      %p229 = scmp.eq.s32.totalorder %s23, 1
      %p230 = scmp.ne.s32.totalorder %s225, %s227
      %p231 = scmp.eq.s32.totalorder %s23, 0
      %p232 = por %p230, %p231
      %p233 = scmp.ne.s32.totalorder %s225, %s227
      %p234 = scmp.eq.s32.totalorder %s28, 1
      %p235 = por %p233, %p234
      %p236 = scmp.ne.s32.totalorder %s227, %s228
      %p237 = scmp.eq.s32.totalorder %s28, 0
      %p238 = por %p236, %p237
      %p239 = scmp.ne.s32.totalorder %s227, %s228
      %p240 = scmp.eq.s32.totalorder %s29, 1
      %p241 = por %p239, %p240
      %p243 = scmp.ne.s32.totalorder %s228, %s242
      %p244 = scmp.eq.s32.totalorder %s29, 0
      %p245 = por %p243, %p244
      %s247 = sadd.s32 %s246, 1
      %p250 = scmp.eq.s32.totalorder %s23, 1
      %p251 = scmp.ne.s32.totalorder %s246, %s248
      %p252 = scmp.eq.s32.totalorder %s23, 0
      %p253 = por %p251, %p252
      %p254 = scmp.ne.s32.totalorder %s246, %s248
      %p255 = scmp.eq.s32.totalorder %s28, 1
      %p256 = por %p254, %p255
      %p257 = scmp.ne.s32.totalorder %s248, %s249
      %p258 = scmp.eq.s32.totalorder %s28, 0
      %p259 = por %p257, %p258
      %p260 = scmp.ne.s32.totalorder %s248, %s249
      %p261 = scmp.eq.s32.totalorder %s29, 1
      %p262 = por %p260, %p261
      %p264 = scmp.ne.s32.totalorder %s249, %s263
      %p265 = scmp.eq.s32.totalorder %s29, 0
      %p266 = por %p264, %p265
      %s268 = sadd.s32 %s267, 1
      %p271 = scmp.eq.s32.totalorder %s23, 1
      %p272 = scmp.ne.s32.totalorder %s267, %s269
      %p273 = scmp.eq.s32.totalorder %s23, 0
      %p274 = por %p272, %p273
      %p275 = scmp.ne.s32.totalorder %s267, %s269
      %p276 = scmp.eq.s32.totalorder %s28, 1
      %p277 = por %p275, %p276
      %p278 = scmp.ne.s32.totalorder %s269, %s270
      %p279 = scmp.eq.s32.totalorder %s28, 0
      %p280 = por %p278, %p279
      %p281 = scmp.ne.s32.totalorder %s269, %s270
      %p282 = scmp.eq.s32.totalorder %s29, 1
      %p283 = por %p281, %p282
      %p285 = scmp.ne.s32.totalorder %s270, %s284
      %p286 = scmp.eq.s32.totalorder %s29, 0
      %p287 = por %p285, %p286
      %s289 = sadd.s32 %s288, 1
      %p292 = scmp.eq.s32.totalorder %s23, 1
      %p293 = scmp.ne.s32.totalorder %s288, %s290
      %p294 = scmp.eq.s32.totalorder %s23, 0
      %p295 = por %p293, %p294
      %p296 = scmp.ne.s32.totalorder %s288, %s290
      %p297 = scmp.eq.s32.totalorder %s28, 1
      %p298 = por %p296, %p297
      %p299 = scmp.ne.s32.totalorder %s290, %s291
      %p300 = scmp.eq.s32.totalorder %s28, 0
      %p301 = por %p299, %p300
      %p302 = scmp.ne.s32.totalorder %s290, %s291
      %p303 = scmp.eq.s32.totalorder %s29, 1
      %p304 = por %p302, %p303
      %p306 = scmp.ne.s32.totalorder %s291, %s305
      %p307 = scmp.eq.s32.totalorder %s29, 0
      %p308 = por %p306, %p307
      %s309 = ssub.s32 %s23, %s30
      %p310 = scmp.eq.s32.totalorder %s309, 0
      %s312 = sadd.s32 %s311, 1
      %s313 = scalar_select %p310, %s311, %s312
      %p316 = pneg %p310
      %p317 = scmp.eq.s32.totalorder %s23, 1
      %p318 = por %p316, %p317
      %p319 = scmp.ne.s32.totalorder %s311, %s314
      %p320 = scmp.eq.s32.totalorder %s23, 0
      %p321 = por %p319, %p320
      %p322 = scmp.ne.s32.totalorder %s311, %s314
      %p323 = scmp.eq.s32.totalorder %s28, 1
      %p324 = por %p322, %p323
      %p325 = scmp.ne.s32.totalorder %s314, %s315
      %p326 = scmp.eq.s32.totalorder %s28, 0
      %p327 = por %p325, %p326
      %p328 = scmp.ne.s32.totalorder %s314, %s315
      %p329 = scmp.eq.s32.totalorder %s29, 1
      %p330 = por %p328, %p329
      %p332 = scmp.ne.s32.totalorder %s315, %s331
      %p333 = scmp.eq.s32.totalorder %s29, 0
      %p334 = por %p332, %p333
      %p335 = scmp.le.s32.totalorder 1, %s23
      %p336 = scmp.lt.s32.totalorder %s23, 3
      %p337 = pnand %p335, %p336
      %p338 = pneg %p337
      // Predicated region
      $region9: #{tpu_custom_call.1} parent=5 // pred_check
        _
      $region10: #{tpu_custom_call.1} parent=5 // pred_check_branch
        %340 = sbr.rel (%p337) target = $region12
      $region11: #{tpu_custom_call.1} parent=5 // pred_region
        %s341 = ssub.s32 %s23, 1
        // Predicated region
        $region13: #{tpu_custom_call.1} parent=11 // pred_check
          %p342 = pneg %p70
        $region14: #{tpu_custom_call.1} parent=11 // pred_check_branch
          %344 = sbr.rel (%p342) target = $region16
        $region15: #{tpu_custom_call.1} parent=11 // pred_region
          _
        $region16: #{tpu_custom_call.1} parent=11 // pred_fallthru
          _
        // Predicated region
        $region17: #{tpu_custom_call.1} parent=11 // pred_check
          %p345 = pneg %p91
        $region18: #{tpu_custom_call.1} parent=11 // pred_check_branch
          %347 = sbr.rel (%p345) target = $region20
        $region19: #{tpu_custom_call.1} parent=11 // pred_region
          _
        $region20: #{tpu_custom_call.1} parent=11 // pred_fallthru
          _
        // Predicated region
        $region21: #{tpu_custom_call.1} parent=11 // pred_check
          %p348 = pneg %p112
        $region22: #{tpu_custom_call.1} parent=11 // pred_check_branch
          %350 = sbr.rel (%p348) target = $region24
        $region23: #{tpu_custom_call.1} parent=11 // pred_region
          _
        $region24: #{tpu_custom_call.1} parent=11 // pred_fallthru
          _
        // Predicated region
        $region25: #{tpu_custom_call.1} parent=11 // pred_check
          %p351 = pneg %p133
        $region26: #{tpu_custom_call.1} parent=11 // pred_check_branch
          %353 = sbr.rel (%p351) target = $region28
        $region27: #{tpu_custom_call.1} parent=11 // pred_region
          _
        $region28: #{tpu_custom_call.1} parent=11 // pred_fallthru
          _
        // Predicated region
        $region29: #{tpu_custom_call.1} parent=11 // pred_check
          %p354 = pneg %p154
        $region30: #{tpu_custom_call.1} parent=11 // pred_check_branch
          %356 = sbr.rel (%p354) target = $region32
        $region31: #{tpu_custom_call.1} parent=11 // pred_region
          _
        $region32: #{tpu_custom_call.1} parent=11 // pred_fallthru
          _
        // Predicated region
        $region33: #{tpu_custom_call.1} parent=11 // pred_check
          %p357 = pneg %p175
        $region34: #{tpu_custom_call.1} parent=11 // pred_check_branch
          %359 = sbr.rel (%p357) target = $region36
        $region35: #{tpu_custom_call.1} parent=11 // pred_region
          _
        $region36: #{tpu_custom_call.1} parent=11 // pred_fallthru
          _
        // Predicated region
        $region37: #{tpu_custom_call.1} parent=11 // pred_check
          %p360 = pneg %p196
        $region38: #{tpu_custom_call.1} parent=11 // pred_check_branch
          %362 = sbr.rel (%p360) target = $region40
        $region39: #{tpu_custom_call.1} parent=11 // pred_region
          _
        $region40: #{tpu_custom_call.1} parent=11 // pred_fallthru
          _
        // Predicated region
        $region41: #{tpu_custom_call.1} parent=11 // pred_check
          %p363 = pneg %p217
        $region42: #{tpu_custom_call.1} parent=11 // pred_check_branch
          %365 = sbr.rel (%p363) target = $region44
        $region43: #{tpu_custom_call.1} parent=11 // pred_region
          _
        $region44: #{tpu_custom_call.1} parent=11 // pred_fallthru
          _
        // Predicated region
        $region45: #{tpu_custom_call.1} parent=11 // pred_check
          %p366 = pneg %p238
        $region46: #{tpu_custom_call.1} parent=11 // pred_check_branch
          %368 = sbr.rel (%p366) target = $region48
        $region47: #{tpu_custom_call.1} parent=11 // pred_region
          %s370 = ssub.s32 2048, 2048
          %371 = vsyncadd [#allocation3], %s370
          %s372 = sshll.u32 [#allocation2], 4
          %s373 = int_to_ptr.vmem [resolvable:$true] %s372
          %378 = dma.hbm_to_vmem [thread:$0]  %s9, 2048, %s373, [#allocation3], 128, 128, 8
        $region48: #{tpu_custom_call.1} parent=11 // pred_fallthru
          _
        // Predicated region
        $region49: #{tpu_custom_call.1} parent=11 // pred_check
          %p379 = pneg %p259
        $region50: #{tpu_custom_call.1} parent=11 // pred_check_branch
          %381 = sbr.rel (%p379) target = $region52
        $region51: #{tpu_custom_call.1} parent=11 // pred_region
          _
        $region52: #{tpu_custom_call.1} parent=11 // pred_fallthru
          _
        // Predicated region
        $region53: #{tpu_custom_call.1} parent=11 // pred_check
          %p382 = pneg %p280
        $region54: #{tpu_custom_call.1} parent=11 // pred_check_branch
          %384 = sbr.rel (%p382) target = $region56
        $region55: #{tpu_custom_call.1} parent=11 // pred_region
          _
        $region56: #{tpu_custom_call.1} parent=11 // pred_fallthru
          _
        // Predicated region
        $region57: #{tpu_custom_call.1} parent=11 // pred_check
          %p385 = pneg %p301
        $region58: #{tpu_custom_call.1} parent=11 // pred_check_branch
          %387 = sbr.rel (%p385) target = $region60
        $region59: #{tpu_custom_call.1} parent=11 // pred_region
          _
        $region60: #{tpu_custom_call.1} parent=11 // pred_fallthru
          _
      $region12: #{tpu_custom_call.1} parent=5 // pred_fallthru
        _
      %p388 = scmp.lt.s32.totalorder %s23, 2
      // Predicated region
      $region61: #{tpu_custom_call.1} parent=5 // pred_check
        %p389 = pneg %p388
      $region62: #{tpu_custom_call.1} parent=5 // pred_check_branch
        %391 = sbr.rel (%p389) target = $region64
      $region63: #{tpu_custom_call.1} parent=5 // pred_region
        // Predicated region
        $region65: #{tpu_custom_call.1} parent=63 // pred_check
          %p392 = pneg %p43
        $region66: #{tpu_custom_call.1} parent=63 // pred_check_branch
          %394 = sbr.rel (%p392) target = $region68
        $region67: #{tpu_custom_call.1} parent=63 // pred_region
          %p395 = scmp.lt.s32.totalorder %s23, 1
          %s396 = scalar_select %p395, %s23, 1
          %s397 = smul.addr %s396, 8
          %s398 = scalar_lea.vmem %s0, %s397
        $region68: #{tpu_custom_call.1} parent=63 // pred_fallthru
          _
      $region64: #{tpu_custom_call.1} parent=5 // pred_fallthru
        _
      %p399 = scmp.le.s32.totalorder 1, %s23
      %p400 = scmp.lt.s32.totalorder %s23, 3
      %p401 = pnand %p399, %p400
      %p402 = pneg %p401
      // Predicated region
      $region69: #{tpu_custom_call.1} parent=5 // pred_check
        _
      $region70: #{tpu_custom_call.1} parent=5 // pred_check_branch
        %404 = sbr.rel (%p401) target = $region72
      $region71: #{tpu_custom_call.1} parent=5 // pred_region
        %s405 = ssub.s32 %s23, 1
        // Predicated region
        $region73: #{tpu_custom_call.1} parent=71 // pred_check
          %p406 = pneg %p238
        $region74: #{tpu_custom_call.1} parent=71 // pred_check_branch
          %408 = sbr.rel (%p406) target = $region76
        $region75: #{tpu_custom_call.1} parent=71 // pred_region
          %409 = dma.done [#allocation3], 2048
        $region76: #{tpu_custom_call.1} parent=71 // pred_fallthru
          _
        %p410 = scmp.lt.s32.totalorder %s28, 1
        %s411 = scalar_select %p410, %s28, 1
        %s412 = smul.addr %s411, 8
        %s413 = scalar_lea.vmem %s0, %s412
        %p414 = pneg %p49
        %p415 = pneg %p46
        %p416 = pneg %p70
        %p417 = pneg %p67
        %p418 = pneg %p91
        %p419 = pneg %p88
        %p420 = pneg %p112
        %p421 = pneg %p109
        %p422 = pneg %p133
        %p423 = pneg %p130
        %p424 = pneg %p154
        %p425 = pneg %p151
        %p426 = pneg %p175
        %p427 = pneg %p172
        %p428 = pneg %p196
        %p429 = pneg %p193
        %p430 = pneg %p217
        %p431 = pneg %p214
        %p432 = pneg %p238
        %p433 = pneg %p235
        %p434 = pneg %p259
        %p435 = pneg %p256
        %p436 = pneg %p280
        %p437 = pneg %p277
        %p438 = pneg %p301
        %p439 = pneg %p298
        %p440 = pneg %p327
        %p441 = pneg %p324
        %s442 = sand.u32 %s314, 1
        %s443 = scalar_lea.sflag [#allocation4], %s442
        %s444 = sand.u32 %s314, 1
        %s445 = smul.addr %s444, 8
        %s446 = scalar_lea.vmem [#allocation5], %s445
        %p447 = scmp.lt.s32.totalorder %s28, 1
        %s448 = scalar_select %p447, %s28, 1
        %s449 = smul.addr %s448, 8
        %s450 = scalar_lea.vmem %s0, %s449
        %v451 = vld [vmem:[%s450] sm:$0xff]
        %v452 = vld [vmem:[%s1] sm:$0xff]
        %v453 = vld [vmem:[%s1 + $0x8] sm:$0xff]
        %v454 = vld [vmem:[%s2] sm:$0x1]
        %v456 = vlaneseq
        %v457 = vshrl.u32 %v456, 7
        %v458 = vsub.s32 0, %v457
        %v459 = vrot.slane %v454, %v458
        %vm461 = vcmask 130048
        %v463 = vsel %vm461, %v451, 0
        %465 = vmatprep.subr.mxu0 0.0
        %466 = vmatpush1.msra.mxu0 0.0
        %467 = vmatprep.subr.mxu0 0.0
        %468 = vmatpush1.msra.mxu0 0.0
        %469 = vmatprep.subr.mxu0 0.0
        %470 = vmatpush1.msra.mxu0 0.0
        %471 = vmatprep.subr.mxu0 0.0
        %472 = vmatpush1.msra.mxu0 0.0
        %473 = vmatprep.subr.mxu0 0.0
        %474 = vmatpush1.msra.mxu0 0.0
        %475 = vmatprep.subr.mxu0 0.0
        %476 = vmatpush1.msra.mxu0 0.0
        %477 = vmatprep.subr.mxu0 0.0
        %478 = vmatpush1.msra.mxu0 0.0
        %479 = vmatprep.subr.mxu0 0.0
        %480 = vmatpush1.msra.mxu0 0.0
        %481 = vmatprep.subr.mxu0 0.0
        %482 = vmatpush1.msra.mxu0 0.0
        %483 = vmatprep.subr.mxu0 0.0
        %484 = vmatpush1.msra.mxu0 0.0
        %485 = vmatprep.subr.mxu0 0.0
        %486 = vmatpush1.msra.mxu0 0.0
        %487 = vmatprep.subr.mxu0 0.0
        %488 = vmatpush1.msra.mxu0 0.0
        %489 = vmatprep.subr.mxu0 0.0
        %490 = vmatpush1.msra.mxu0 0.0
        %491 = vmatprep.subr.mxu0 0.0
        %492 = vmatpush1.msra.mxu0 0.0
        %493 = vmatprep.subr.mxu0 0.0
        %494 = vmatpush1.msra.mxu0 %v453
        %495 = vmatprep.subr.mxu0 0.0
        %496 = vmatpush1.msra.mxu0 %v452
        %497 = vmatprep.subr.mxu0 0.0
        %498 = vmatpush2.msra.mxu0 0.0
        %499 = vmatprep.subr.mxu0 0.0
        %500 = vmatpush2.msra.mxu0 0.0
        %501 = vmatprep.subr.mxu0 0.0
        %502 = vmatpush2.msra.mxu0 0.0
        %503 = vmatprep.subr.mxu0 0.0
        %504 = vmatpush2.msra.mxu0 0.0
        %505 = vmatprep.subr.mxu0 0.0
        %506 = vmatpush2.msra.mxu0 0.0
        %507 = vmatprep.subr.mxu0 0.0
        %508 = vmatpush2.msra.mxu0 0.0
        %509 = vmatprep.subr.mxu0 0.0
        %510 = vmatpush2.msra.mxu0 0.0
        %511 = vmatprep.subr.mxu0 0.0
        %512 = vmatpush2.msra.mxu0 0.0
        %513 = vmatprep.subr.mxu0 0.0
        %514 = vmatpush2.msra.mxu0 0.0
        %515 = vmatprep.subr.mxu0 0.0
        %516 = vmatpush2.msra.mxu0 0.0
        %517 = vmatprep.subr.mxu0 0.0
        %518 = vmatpush2.msra.mxu0 0.0
        %519 = vmatprep.subr.mxu0 0.0
        %520 = vmatpush2.msra.mxu0 0.0
        %521 = vmatprep.subr.mxu0 0.0
        %522 = vmatpush2.msra.mxu0 0.0
        %523 = vmatprep.subr.mxu0 0.0
        %524 = vmatpush2.msra.mxu0 0.0
        %525 = vmatprep.subr.mxu0 0.0
        %526 = vmatpush2.msra.mxu0 0.0
        %527 = vmatprep.subr.mxu0 0.0
        %528 = vmatpush2.msra.mxu0 0.0
        %529 = vmatprep.mubr.f32.mxu0 0.0
        %530 = vmatmul.mubr.f32.gmra.mxu0 %v463
        %v531 = vpop.f32.mrf.mxu0
        %v532 = vadd.f32 %v459, %v531
        %v533 = vpop.f32.mrf.mxu0
        %534 = vdwg.mxu0
        %v535 = vmax.f32 %v532, 0.0
        %v536 = vld [vmem:[%s3] sm:$0xff]
        %v537 = vld [vmem:[%s3 + $0x8] sm:$0xff]
        %v538 = vld [vmem:[%s3 + $0x10] sm:$0xff]
        %v539 = vld [vmem:[%s3 + $0x18] sm:$0xff]
        %v540 = vld [vmem:[%s3 + $0x20] sm:$0xff]
        %v541 = vld [vmem:[%s3 + $0x28] sm:$0xff]
        %v542 = vld [vmem:[%s3 + $0x30] sm:$0xff]
        %v543 = vld [vmem:[%s3 + $0x38] sm:$0xff]
        %v544 = vld [vmem:[%s3 + $0x40] sm:$0xff]
        %v545 = vld [vmem:[%s3 + $0x48] sm:$0xff]
        %v546 = vld [vmem:[%s3 + $0x50] sm:$0xff]
        %v547 = vld [vmem:[%s3 + $0x58] sm:$0xff]
        %v548 = vld [vmem:[%s3 + $0x60] sm:$0xff]
        %v549 = vld [vmem:[%s3 + $0x68] sm:$0xff]
        %v550 = vld [vmem:[%s3 + $0x70] sm:$0xff]
        %v551 = vld [vmem:[%s3 + $0x78] sm:$0xff]
        %v552 = vld [vmem:[%s4] sm:$0x1]
        %v554 = vlaneseq
        %v555 = vshrl.u32 %v554, 7
        %v556 = vsub.s32 0, %v555
        %v557 = vrot.slane %v552, %v556
        %559 = vmatprep.subr.mxu0 0.0
        %560 = vmatpush1.msra.mxu0 %v551
        %561 = vmatprep.subr.mxu0 0.0
        %562 = vmatpush1.msra.mxu0 %v550
        %563 = vmatprep.subr.mxu0 0.0
        %564 = vmatpush1.msra.mxu0 %v549
        %565 = vmatprep.subr.mxu0 0.0
        %566 = vmatpush1.msra.mxu0 %v548
        %567 = vmatprep.subr.mxu0 0.0
        %568 = vmatpush1.msra.mxu0 %v547
        %569 = vmatprep.subr.mxu0 0.0
        %570 = vmatpush1.msra.mxu0 %v546
        %571 = vmatprep.subr.mxu0 0.0
        %572 = vmatpush1.msra.mxu0 %v545
        %573 = vmatprep.subr.mxu0 0.0
        %574 = vmatpush1.msra.mxu0 %v544
        %575 = vmatprep.subr.mxu0 0.0
        %576 = vmatpush1.msra.mxu0 %v543
        %577 = vmatprep.subr.mxu0 0.0
        %578 = vmatpush1.msra.mxu0 %v542
        %579 = vmatprep.subr.mxu0 0.0
        %580 = vmatpush1.msra.mxu0 %v541
        %581 = vmatprep.subr.mxu0 0.0
        %582 = vmatpush1.msra.mxu0 %v540
        %583 = vmatprep.subr.mxu0 0.0
        %584 = vmatpush1.msra.mxu0 %v539
        %585 = vmatprep.subr.mxu0 0.0
        %586 = vmatpush1.msra.mxu0 %v538
        %587 = vmatprep.subr.mxu0 0.0
        %588 = vmatpush1.msra.mxu0 %v537
        %589 = vmatprep.subr.mxu0 0.0
        %590 = vmatpush1.msra.mxu0 %v536
        %591 = vmatprep.subr.mxu0 0.0
        %592 = vmatpush2.msra.mxu0 0.0
        %593 = vmatprep.subr.mxu0 0.0
        %594 = vmatpush2.msra.mxu0 0.0
        %595 = vmatprep.subr.mxu0 0.0
        %596 = vmatpush2.msra.mxu0 0.0
        %597 = vmatprep.subr.mxu0 0.0
        %598 = vmatpush2.msra.mxu0 0.0
        %599 = vmatprep.subr.mxu0 0.0
        %600 = vmatpush2.msra.mxu0 0.0
        %601 = vmatprep.subr.mxu0 0.0
        %602 = vmatpush2.msra.mxu0 0.0
        %603 = vmatprep.subr.mxu0 0.0
        %604 = vmatpush2.msra.mxu0 0.0
        %605 = vmatprep.subr.mxu0 0.0
        %606 = vmatpush2.msra.mxu0 0.0
        %607 = vmatprep.subr.mxu0 0.0
        %608 = vmatpush2.msra.mxu0 0.0
        %609 = vmatprep.subr.mxu0 0.0
        %610 = vmatpush2.msra.mxu0 0.0
        %611 = vmatprep.subr.mxu0 0.0
        %612 = vmatpush2.msra.mxu0 0.0
        %613 = vmatprep.subr.mxu0 0.0
        %614 = vmatpush2.msra.mxu0 0.0
        %615 = vmatprep.subr.mxu0 0.0
        %616 = vmatpush2.msra.mxu0 0.0
        %617 = vmatprep.subr.mxu0 0.0
        %618 = vmatpush2.msra.mxu0 0.0
        %619 = vmatprep.subr.mxu0 0.0
        %620 = vmatpush2.msra.mxu0 0.0
        %621 = vmatprep.subr.mxu0 0.0
        %622 = vmatpush2.msra.mxu0 0.0
        %623 = vmatprep.mubr.f32.mxu0 0.0
        %624 = vmatmul.mubr.f32.gmra.mxu0 %v535
        %v625 = vpop.f32.mrf.mxu0
        %v626 = vadd.f32 %v557, %v625
        %v627 = vpop.f32.mrf.mxu0
        %628 = vdwg.mxu0
        %v629 = vmax.f32 %v626, 0.0
        %v630 = vld [vmem:[%s5] sm:$0xff]
        %v631 = vld [vmem:[%s5 + $0x8] sm:$0xff]
        %v632 = vld [vmem:[%s5 + $0x10] sm:$0xff]
        %v633 = vld [vmem:[%s5 + $0x18] sm:$0xff]
        %v634 = vld [vmem:[%s5 + $0x20] sm:$0xff]
        %v635 = vld [vmem:[%s5 + $0x28] sm:$0xff]
        %v636 = vld [vmem:[%s5 + $0x30] sm:$0xff]
        %v637 = vld [vmem:[%s5 + $0x38] sm:$0xff]
        %v638 = vld [vmem:[%s5 + $0x40] sm:$0xff]
        %v639 = vld [vmem:[%s5 + $0x48] sm:$0xff]
        %v640 = vld [vmem:[%s5 + $0x50] sm:$0xff]
        %v641 = vld [vmem:[%s5 + $0x58] sm:$0xff]
        %v642 = vld [vmem:[%s5 + $0x60] sm:$0xff]
        %v643 = vld [vmem:[%s5 + $0x68] sm:$0xff]
        %v644 = vld [vmem:[%s5 + $0x70] sm:$0xff]
        %v645 = vld [vmem:[%s5 + $0x78] sm:$0xff]
        %v646 = vld [vmem:[%s6] sm:$0x1]
        %v648 = vlaneseq
        %v649 = vshrl.u32 %v648, 7
        %v650 = vsub.s32 0, %v649
        %v651 = vrot.slane %v646, %v650
        %653 = vmatprep.subr.mxu0 0.0
        %654 = vmatpush1.msra.mxu0 %v645
        %655 = vmatprep.subr.mxu0 0.0
        %656 = vmatpush1.msra.mxu0 %v644
        %657 = vmatprep.subr.mxu0 0.0
        %658 = vmatpush1.msra.mxu0 %v643
        %659 = vmatprep.subr.mxu0 0.0
        %660 = vmatpush1.msra.mxu0 %v642
        %661 = vmatprep.subr.mxu0 0.0
        %662 = vmatpush1.msra.mxu0 %v641
        %663 = vmatprep.subr.mxu0 0.0
        %664 = vmatpush1.msra.mxu0 %v640
        %665 = vmatprep.subr.mxu0 0.0
        %666 = vmatpush1.msra.mxu0 %v639
        %667 = vmatprep.subr.mxu0 0.0
        %668 = vmatpush1.msra.mxu0 %v638
        %669 = vmatprep.subr.mxu0 0.0
        %670 = vmatpush1.msra.mxu0 %v637
        %671 = vmatprep.subr.mxu0 0.0
        %672 = vmatpush1.msra.mxu0 %v636
        %673 = vmatprep.subr.mxu0 0.0
        %674 = vmatpush1.msra.mxu0 %v635
        %675 = vmatprep.subr.mxu0 0.0
        %676 = vmatpush1.msra.mxu0 %v634
        %677 = vmatprep.subr.mxu0 0.0
        %678 = vmatpush1.msra.mxu0 %v633
        %679 = vmatprep.subr.mxu0 0.0
        %680 = vmatpush1.msra.mxu0 %v632
        %681 = vmatprep.subr.mxu0 0.0
        %682 = vmatpush1.msra.mxu0 %v631
        %683 = vmatprep.subr.mxu0 0.0
        %684 = vmatpush1.msra.mxu0 %v630
        %685 = vmatprep.subr.mxu0 0.0
        %686 = vmatpush2.msra.mxu0 0.0
        %687 = vmatprep.subr.mxu0 0.0
        %688 = vmatpush2.msra.mxu0 0.0
        %689 = vmatprep.subr.mxu0 0.0
        %690 = vmatpush2.msra.mxu0 0.0
        %691 = vmatprep.subr.mxu0 0.0
        %692 = vmatpush2.msra.mxu0 0.0
        %693 = vmatprep.subr.mxu0 0.0
        %694 = vmatpush2.msra.mxu0 0.0
        %695 = vmatprep.subr.mxu0 0.0
        %696 = vmatpush2.msra.mxu0 0.0
        %697 = vmatprep.subr.mxu0 0.0
        %698 = vmatpush2.msra.mxu0 0.0
        %699 = vmatprep.subr.mxu0 0.0
        %700 = vmatpush2.msra.mxu0 0.0
        %701 = vmatprep.subr.mxu0 0.0
        %702 = vmatpush2.msra.mxu0 0.0
        %703 = vmatprep.subr.mxu0 0.0
        %704 = vmatpush2.msra.mxu0 0.0
        %705 = vmatprep.subr.mxu0 0.0
        %706 = vmatpush2.msra.mxu0 0.0
        %707 = vmatprep.subr.mxu0 0.0
        %708 = vmatpush2.msra.mxu0 0.0
        %709 = vmatprep.subr.mxu0 0.0
        %710 = vmatpush2.msra.mxu0 0.0
        %711 = vmatprep.subr.mxu0 0.0
        %712 = vmatpush2.msra.mxu0 0.0
        %713 = vmatprep.subr.mxu0 0.0
        %714 = vmatpush2.msra.mxu0 0.0
        %715 = vmatprep.subr.mxu0 0.0
        %716 = vmatpush2.msra.mxu0 0.0
        %717 = vmatprep.mubr.f32.mxu0 0.0
        %718 = vmatmul.mubr.f32.gmra.mxu0 %v629
        %v719 = vpop.f32.mrf.mxu0
        %v720 = vadd.f32 %v651, %v719
        %v721 = vpop.f32.mrf.mxu0
        %722 = vdwg.mxu0
        %v723 = vmax.f32 %v720, 0.0
        %v724 = vld [vmem:[%s7] sm:$0xff]
        %v725 = vld [vmem:[%s7 + $0x8] sm:$0xff]
        %v726 = vld [vmem:[%s7 + $0x10] sm:$0xff]
        %v727 = vld [vmem:[%s7 + $0x18] sm:$0xff]
        %v728 = vld [vmem:[%s7 + $0x20] sm:$0xff]
        %v729 = vld [vmem:[%s7 + $0x28] sm:$0xff]
        %v730 = vld [vmem:[%s7 + $0x30] sm:$0xff]
        %v731 = vld [vmem:[%s7 + $0x38] sm:$0xff]
        %v732 = vld [vmem:[%s7 + $0x40] sm:$0xff]
        %v733 = vld [vmem:[%s7 + $0x48] sm:$0xff]
        %v734 = vld [vmem:[%s7 + $0x50] sm:$0xff]
        %v735 = vld [vmem:[%s7 + $0x58] sm:$0xff]
        %v736 = vld [vmem:[%s7 + $0x60] sm:$0xff]
        %v737 = vld [vmem:[%s7 + $0x68] sm:$0xff]
        %v738 = vld [vmem:[%s7 + $0x70] sm:$0xff]
        %v739 = vld [vmem:[%s7 + $0x78] sm:$0xff]
        %v740 = vld [vmem:[%s8] sm:$0x1]
        %v742 = vlaneseq
        %v743 = vshrl.u32 %v742, 7
        %v744 = vsub.s32 0, %v743
        %v745 = vrot.slane %v740, %v744
        %747 = vmatprep.subr.mxu0 0.0
        %748 = vmatpush1.msra.mxu0 %v739
        %749 = vmatprep.subr.mxu0 0.0
        %750 = vmatpush1.msra.mxu0 %v738
        %751 = vmatprep.subr.mxu0 0.0
        %752 = vmatpush1.msra.mxu0 %v737
        %753 = vmatprep.subr.mxu0 0.0
        %754 = vmatpush1.msra.mxu0 %v736
        %755 = vmatprep.subr.mxu0 0.0
        %756 = vmatpush1.msra.mxu0 %v735
        %757 = vmatprep.subr.mxu0 0.0
        %758 = vmatpush1.msra.mxu0 %v734
        %759 = vmatprep.subr.mxu0 0.0
        %760 = vmatpush1.msra.mxu0 %v733
        %761 = vmatprep.subr.mxu0 0.0
        %762 = vmatpush1.msra.mxu0 %v732
        %763 = vmatprep.subr.mxu0 0.0
        %764 = vmatpush1.msra.mxu0 %v731
        %765 = vmatprep.subr.mxu0 0.0
        %766 = vmatpush1.msra.mxu0 %v730
        %767 = vmatprep.subr.mxu0 0.0
        %768 = vmatpush1.msra.mxu0 %v729
        %769 = vmatprep.subr.mxu0 0.0
        %770 = vmatpush1.msra.mxu0 %v728
        %771 = vmatprep.subr.mxu0 0.0
        %772 = vmatpush1.msra.mxu0 %v727
        %773 = vmatprep.subr.mxu0 0.0
        %774 = vmatpush1.msra.mxu0 %v726
        %775 = vmatprep.subr.mxu0 0.0
        %776 = vmatpush1.msra.mxu0 %v725
        %777 = vmatprep.subr.mxu0 0.0
        %778 = vmatpush1.msra.mxu0 %v724
        %779 = vmatprep.subr.mxu0 0.0
        %780 = vmatpush2.msra.mxu0 0.0
        %781 = vmatprep.subr.mxu0 0.0
        %782 = vmatpush2.msra.mxu0 0.0
        %783 = vmatprep.subr.mxu0 0.0
        %784 = vmatpush2.msra.mxu0 0.0
        %785 = vmatprep.subr.mxu0 0.0
        %786 = vmatpush2.msra.mxu0 0.0
        %787 = vmatprep.subr.mxu0 0.0
        %788 = vmatpush2.msra.mxu0 0.0
        %789 = vmatprep.subr.mxu0 0.0
        %790 = vmatpush2.msra.mxu0 0.0
        %791 = vmatprep.subr.mxu0 0.0
        %792 = vmatpush2.msra.mxu0 0.0
        %793 = vmatprep.subr.mxu0 0.0
        %794 = vmatpush2.msra.mxu0 0.0
        %795 = vmatprep.subr.mxu0 0.0
        %796 = vmatpush2.msra.mxu0 0.0
        %797 = vmatprep.subr.mxu0 0.0
        %798 = vmatpush2.msra.mxu0 0.0
        %799 = vmatprep.subr.mxu0 0.0
        %800 = vmatpush2.msra.mxu0 0.0
        %801 = vmatprep.subr.mxu0 0.0
        %802 = vmatpush2.msra.mxu0 0.0
        %803 = vmatprep.subr.mxu0 0.0
        %804 = vmatpush2.msra.mxu0 0.0
        %805 = vmatprep.subr.mxu0 0.0
        %806 = vmatpush2.msra.mxu0 0.0
        %807 = vmatprep.subr.mxu0 0.0
        %808 = vmatpush2.msra.mxu0 0.0
        %809 = vmatprep.subr.mxu0 0.0
        %810 = vmatpush2.msra.mxu0 0.0
        %811 = vmatprep.mubr.f32.mxu0 0.0
        %812 = vmatmul.mubr.f32.gmra.mxu0 %v723
        %v813 = vpop.f32.mrf.mxu0
        %v814 = vadd.f32 %v745, %v813
        %v815 = vpop.f32.mrf.mxu0
        %816 = vdwg.mxu0
        %v817 = vld [vmem:[#allocation2] sm:$0xff]
        %v818 = vld [vmem:[#allocation2 + $0x8] sm:$0xff]
        %v819 = vld [vmem:[#allocation2 + $0x10] sm:$0xff]
        %v820 = vld [vmem:[#allocation2 + $0x18] sm:$0xff]
        %v821 = vld [vmem:[#allocation2 + $0x20] sm:$0xff]
        %v822 = vld [vmem:[#allocation2 + $0x28] sm:$0xff]
        %v823 = vld [vmem:[#allocation2 + $0x30] sm:$0xff]
        %v824 = vld [vmem:[#allocation2 + $0x38] sm:$0xff]
        %v825 = vld [vmem:[#allocation2 + $0x40] sm:$0xff]
        %v826 = vld [vmem:[#allocation2 + $0x48] sm:$0xff]
        %v827 = vld [vmem:[#allocation2 + $0x50] sm:$0xff]
        %v828 = vld [vmem:[#allocation2 + $0x58] sm:$0xff]
        %v829 = vld [vmem:[#allocation2 + $0x60] sm:$0xff]
        %v830 = vld [vmem:[#allocation2 + $0x68] sm:$0xff]
        %v831 = vld [vmem:[#allocation2 + $0x70] sm:$0xff]
        %v832 = vld [vmem:[#allocation2 + $0x78] sm:$0xff]
        %v833 = vld [vmem:[%s10] sm:$0x1]
        %v835 = vlaneseq
        %v836 = vshrl.u32 %v835, 7
        %v837 = vsub.s32 0, %v836
        %v838 = vrot.slane %v833, %v837
        %840 = vmatprep.subr.mxu0 0.0
        %841 = vmatpush1.msra.mxu0 %v832
        %842 = vmatprep.subr.mxu0 0.0
        %843 = vmatpush1.msra.mxu0 %v831
        %844 = vmatprep.subr.mxu0 0.0
        %845 = vmatpush1.msra.mxu0 %v830
        %846 = vmatprep.subr.mxu0 0.0
        %847 = vmatpush1.msra.mxu0 %v829
        %848 = vmatprep.subr.mxu0 0.0
        %849 = vmatpush1.msra.mxu0 %v828
        %850 = vmatprep.subr.mxu0 0.0
        %851 = vmatpush1.msra.mxu0 %v827
        %852 = vmatprep.subr.mxu0 0.0
        %853 = vmatpush1.msra.mxu0 %v826
        %854 = vmatprep.subr.mxu0 0.0
        %855 = vmatpush1.msra.mxu0 %v825
        %856 = vmatprep.subr.mxu0 0.0
        %857 = vmatpush1.msra.mxu0 %v824
        %858 = vmatprep.subr.mxu0 0.0
        %859 = vmatpush1.msra.mxu0 %v823
        %860 = vmatprep.subr.mxu0 0.0
        %861 = vmatpush1.msra.mxu0 %v822
        %862 = vmatprep.subr.mxu0 0.0
        %863 = vmatpush1.msra.mxu0 %v821
        %864 = vmatprep.subr.mxu0 0.0
        %865 = vmatpush1.msra.mxu0 %v820
        %866 = vmatprep.subr.mxu0 0.0
        %867 = vmatpush1.msra.mxu0 %v819
        %868 = vmatprep.subr.mxu0 0.0
        %869 = vmatpush1.msra.mxu0 %v818
        %870 = vmatprep.subr.mxu0 0.0
        %871 = vmatpush1.msra.mxu0 %v817
        %872 = vmatprep.subr.mxu0 0.0
        %873 = vmatpush2.msra.mxu0 0.0
        %874 = vmatprep.subr.mxu0 0.0
        %875 = vmatpush2.msra.mxu0 0.0
        %876 = vmatprep.subr.mxu0 0.0
        %877 = vmatpush2.msra.mxu0 0.0
        %878 = vmatprep.subr.mxu0 0.0
        %879 = vmatpush2.msra.mxu0 0.0
        %880 = vmatprep.subr.mxu0 0.0
        %881 = vmatpush2.msra.mxu0 0.0
        %882 = vmatprep.subr.mxu0 0.0
        %883 = vmatpush2.msra.mxu0 0.0
        %884 = vmatprep.subr.mxu0 0.0
        %885 = vmatpush2.msra.mxu0 0.0
        %886 = vmatprep.subr.mxu0 0.0
        %887 = vmatpush2.msra.mxu0 0.0
        %888 = vmatprep.subr.mxu0 0.0
        %889 = vmatpush2.msra.mxu0 0.0
        %890 = vmatprep.subr.mxu0 0.0
        %891 = vmatpush2.msra.mxu0 0.0
        %892 = vmatprep.subr.mxu0 0.0
        %893 = vmatpush2.msra.mxu0 0.0
        %894 = vmatprep.subr.mxu0 0.0
        %895 = vmatpush2.msra.mxu0 0.0
        %896 = vmatprep.subr.mxu0 0.0
        %897 = vmatpush2.msra.mxu0 0.0
        %898 = vmatprep.subr.mxu0 0.0
        %899 = vmatpush2.msra.mxu0 0.0
        %900 = vmatprep.subr.mxu0 0.0
        %901 = vmatpush2.msra.mxu0 0.0
        %902 = vmatprep.subr.mxu0 0.0
        %903 = vmatpush2.msra.mxu0 0.0
        %904 = vmatprep.mubr.f32.mxu0 0.0
        %905 = vmatmul.mubr.f32.gmra.mxu0 %v629
        %v906 = vpop.f32.mrf.mxu0
        %v907 = vadd.f32 %v838, %v906
        %v908 = vpop.f32.mrf.mxu0
        %909 = vdwg.mxu0
        %v910 = vmax.f32 %v907, 0.0
        %v911 = vld [vmem:[%s11] sm:$0xff]
        %v912 = vld [vmem:[%s11 + $0x8] sm:$0xff]
        %v913 = vld [vmem:[%s11 + $0x10] sm:$0xff]
        %v914 = vld [vmem:[%s11 + $0x18] sm:$0xff]
        %v915 = vld [vmem:[%s11 + $0x20] sm:$0xff]
        %v916 = vld [vmem:[%s11 + $0x28] sm:$0xff]
        %v917 = vld [vmem:[%s11 + $0x30] sm:$0xff]
        %v918 = vld [vmem:[%s11 + $0x38] sm:$0xff]
        %v919 = vld [vmem:[%s11 + $0x40] sm:$0xff]
        %v920 = vld [vmem:[%s11 + $0x48] sm:$0xff]
        %v921 = vld [vmem:[%s11 + $0x50] sm:$0xff]
        %v922 = vld [vmem:[%s11 + $0x58] sm:$0xff]
        %v923 = vld [vmem:[%s11 + $0x60] sm:$0xff]
        %v924 = vld [vmem:[%s11 + $0x68] sm:$0xff]
        %v925 = vld [vmem:[%s11 + $0x70] sm:$0xff]
        %v926 = vld [vmem:[%s11 + $0x78] sm:$0xff]
        %v927 = vld [vmem:[%s12] sm:$0x1]
        %v929 = vlaneseq
        %v930 = vshrl.u32 %v929, 7
        %v931 = vsub.s32 0, %v930
        %v932 = vrot.slane %v927, %v931
        %934 = vmatprep.subr.mxu0 0.0
        %935 = vmatpush1.msra.mxu0 %v926
        %936 = vmatprep.subr.mxu0 0.0
        %937 = vmatpush1.msra.mxu0 %v925
        %938 = vmatprep.subr.mxu0 0.0
        %939 = vmatpush1.msra.mxu0 %v924
        %940 = vmatprep.subr.mxu0 0.0
        %941 = vmatpush1.msra.mxu0 %v923
        %942 = vmatprep.subr.mxu0 0.0
        %943 = vmatpush1.msra.mxu0 %v922
        %944 = vmatprep.subr.mxu0 0.0
        %945 = vmatpush1.msra.mxu0 %v921
        %946 = vmatprep.subr.mxu0 0.0
        %947 = vmatpush1.msra.mxu0 %v920
        %948 = vmatprep.subr.mxu0 0.0
        %949 = vmatpush1.msra.mxu0 %v919
        %950 = vmatprep.subr.mxu0 0.0
        %951 = vmatpush1.msra.mxu0 %v918
        %952 = vmatprep.subr.mxu0 0.0
        %953 = vmatpush1.msra.mxu0 %v917
        %954 = vmatprep.subr.mxu0 0.0
        %955 = vmatpush1.msra.mxu0 %v916
        %956 = vmatprep.subr.mxu0 0.0
        %957 = vmatpush1.msra.mxu0 %v915
        %958 = vmatprep.subr.mxu0 0.0
        %959 = vmatpush1.msra.mxu0 %v914
        %960 = vmatprep.subr.mxu0 0.0
        %961 = vmatpush1.msra.mxu0 %v913
        %962 = vmatprep.subr.mxu0 0.0
        %963 = vmatpush1.msra.mxu0 %v912
        %964 = vmatprep.subr.mxu0 0.0
        %965 = vmatpush1.msra.mxu0 %v911
        %966 = vmatprep.subr.mxu0 0.0
        %967 = vmatpush2.msra.mxu0 0.0
        %968 = vmatprep.subr.mxu0 0.0
        %969 = vmatpush2.msra.mxu0 0.0
        %970 = vmatprep.subr.mxu0 0.0
        %971 = vmatpush2.msra.mxu0 0.0
        %972 = vmatprep.subr.mxu0 0.0
        %973 = vmatpush2.msra.mxu0 0.0
        %974 = vmatprep.subr.mxu0 0.0
        %975 = vmatpush2.msra.mxu0 0.0
        %976 = vmatprep.subr.mxu0 0.0
        %977 = vmatpush2.msra.mxu0 0.0
        %978 = vmatprep.subr.mxu0 0.0
        %979 = vmatpush2.msra.mxu0 0.0
        %980 = vmatprep.subr.mxu0 0.0
        %981 = vmatpush2.msra.mxu0 0.0
        %982 = vmatprep.subr.mxu0 0.0
        %983 = vmatpush2.msra.mxu0 0.0
        %984 = vmatprep.subr.mxu0 0.0
        %985 = vmatpush2.msra.mxu0 0.0
        %986 = vmatprep.subr.mxu0 0.0
        %987 = vmatpush2.msra.mxu0 0.0
        %988 = vmatprep.subr.mxu0 0.0
        %989 = vmatpush2.msra.mxu0 0.0
        %990 = vmatprep.subr.mxu0 0.0
        %991 = vmatpush2.msra.mxu0 0.0
        %992 = vmatprep.subr.mxu0 0.0
        %993 = vmatpush2.msra.mxu0 0.0
        %994 = vmatprep.subr.mxu0 0.0
        %995 = vmatpush2.msra.mxu0 0.0
        %996 = vmatprep.subr.mxu0 0.0
        %997 = vmatpush2.msra.mxu0 0.0
        %998 = vmatprep.mubr.f32.mxu0 0.0
        %999 = vmatmul.mubr.f32.gmra.mxu0 %v910
        %v1000 = vpop.f32.mrf.mxu0
        %v1001 = vadd.f32 %v932, %v1000
        %v1002 = vpop.f32.mrf.mxu0
        %1003 = vdwg.mxu0
        %1005 = vrot.lane.b32.xlu0 %v1001, 120
        %v1006 = vpop.permute.xlu0 %1005
        %v1008 = vadd.f32 %v1001, %v1006
        %1009 = vrot.lane.b32.xlu0 %v1001, 112
        %v1010 = vpop.permute.xlu0 %1009
        %v1012 = vadd.f32 %v1008, %v1010
        %1013 = vrot.lane.b32.xlu0 %v1001, 104
        %v1014 = vpop.permute.xlu0 %1013
        %v1016 = vadd.f32 %v1012, %v1014
        %v1017 = vmul.f32 %v1016, 0.25
        %1019 = vrot.lane.b32.xlu0 %v1017, 8
        %v1020 = vpop.permute.xlu0 %1019
        %1022 = vrot.lane.b32.xlu0 %v1017, 16
        %v1023 = vpop.permute.xlu0 %1022
        %1025 = vrot.lane.b32.xlu0 %v1017, 24
        %v1026 = vpop.permute.xlu0 %1025
        %vm1028 = vcmask 64512
        %v1029 = vsel %vm1028, %v1017, %v1020
        %v1030 = vsel %vm461, %v1029, %v1023
        %vm1031 = vcmask 195584
        %v1032 = vsel %vm1031, %v1030, %v1026
        %v1033 = vadd.f32 %v814, %v1001
        %v1034 = vsub.f32 %v1033, %v1032
        %v1035 = vsel %vm1028, %v1034, -inf
        %1036 = vmax.xlane.f32.xlu0 %v1035
        %v1037 = vpop.xlane.xlu0 %1036
        %v1038 = vsub.f32 %v1034, %v1037
        %v1039 = vmul.f32 %v1038, 1.442695
        %v1040 = vpow.pop %v1039
        %v1041 = vsel %vm1028, %v1040, 0.0
        %1042 = vadd.xlane.f32.xlu0 %v1041
        %v1043 = vpop.xlane.xlu0 %1042
        %v1044 = vrcp.pop %v1043
        %v1045 = vmul.f32 %v1043, %v1044
        %v1046 = vsub.f32 2.0, %v1045
        %v1047 = vmul.f32 %v1044, %v1046
        %v1048 = vmul.f32 %v1040, %v1047
        %vm1049 = vcmask 130112
        %v1050 = vsel %vm1049, %v1034, -inf
        %1051 = vmax.xlane.f32.xlu0 %v1050
        %v1052 = vpop.xlane.xlu0 %1051
        %v1053 = vsub.f32 %v1034, %v1052
        %v1054 = vmul.f32 %v1053, 1.442695
        %v1055 = vpow.pop %v1054
        %1057 = vrot.lane.b32.xlu0 %v1055, 120
        %v1058 = vpop.permute.xlu0 %1057
        %v1060 = vsel %vm1028, %v1058, 0.0
        %1061 = vadd.xlane.f32.xlu0 %v1060
        %v1062 = vpop.xlane.xlu0 %1061
        %v1063 = vrcp.pop %v1062
        %v1064 = vmul.f32 %v1062, %v1063
        %v1065 = vsub.f32 2.0, %v1064
        %v1066 = vmul.f32 %v1063, %v1065
        %v1067 = vmul.f32 %v1055, %v1066
        %vm1068 = vcmask 195712
        %v1069 = vsel %vm1068, %v1034, -inf
        %1070 = vmax.xlane.f32.xlu0 %v1069
        %v1071 = vpop.xlane.xlu0 %1070
        %v1072 = vsub.f32 %v1034, %v1071
        %v1073 = vmul.f32 %v1072, 1.442695
        %v1074 = vpow.pop %v1073
        %1076 = vrot.lane.b32.xlu0 %v1074, 112
        %v1077 = vpop.permute.xlu0 %1076
        %v1079 = vsel %vm1028, %v1077, 0.0
        %1080 = vadd.xlane.f32.xlu0 %v1079
        %v1081 = vpop.xlane.xlu0 %1080
        %v1082 = vrcp.pop %v1081
        %v1083 = vmul.f32 %v1081, %v1082
        %v1084 = vsub.f32 2.0, %v1083
        %v1085 = vmul.f32 %v1082, %v1084
        %v1086 = vmul.f32 %v1074, %v1085
        %vm1087 = vcmask 261312
        %v1088 = vsel %vm1087, %v1034, -inf
        %1089 = vmax.xlane.f32.xlu0 %v1088
        %v1090 = vpop.xlane.xlu0 %1089
        %v1091 = vsub.f32 %v1034, %v1090
        %v1092 = vmul.f32 %v1091, 1.442695
        %v1093 = vpow.pop %v1092
        %1095 = vrot.lane.b32.xlu0 %v1093, 104
        %v1096 = vpop.permute.xlu0 %1095
        %v1098 = vsel %vm1028, %v1096, 0.0
        %1099 = vadd.xlane.f32.xlu0 %v1098
        %v1100 = vpop.xlane.xlu0 %1099
        %v1101 = vrcp.pop %v1100
        %v1102 = vmul.f32 %v1100, %v1101
        %v1103 = vsub.f32 2.0, %v1102
        %v1104 = vmul.f32 %v1101, %v1103
        %v1105 = vmul.f32 %v1093, %v1104
        %v1106 = vsel %vm1028, %v1048, %v1067
        %v1107 = vsel %vm461, %v1106, %v1086
        %v1108 = vsel %vm1031, %v1107, %v1105
        %vm1109 = vcmask 261120
        %1110 = vst.msk [vmem:[%s446] sm:$0xff] %vm1109, %v1108
        %s1111 = sand.u32 %s314, 1
        %s1112 = scalar_lea.sflag [#allocation4], %s1111
        %s1113 = sand.u32 %s314, 1
        %s1114 = smul.addr %s1113, 8
        %s1115 = scalar_lea.vmem [#allocation5], %s1114
        // Predicated region
        $region77: #{tpu_custom_call.1} parent=71 // pred_check
          %p1116 = pneg %p324
        $region78: #{tpu_custom_call.1} parent=71 // pred_check_branch
          %1118 = sbr.rel (%p1116) target = $region80
        $region79: #{tpu_custom_call.1} parent=71 // pred_region
          %s1120 = ssub.s32 128, 128
          %1121 = vsyncadd %s1112, %s1120
          %s1122 = smul.addr %s28, 128
          %s1123 = scalar_lea.hbm %s13, %s1122
          %s1125 = sshll.u32 %s1115, 4
          %s1126 = int_to_ptr.vmem [resolvable:$true] %s1125
          %1128 = dma.vmem_to_hbm [thread:$0]  %s1126, 128, %s1123, %s1112
        $region80: #{tpu_custom_call.1} parent=71 // pred_fallthru
          _
      $region72: #{tpu_custom_call.1} parent=5 // pred_fallthru
        _
      %p1129 = scmp.le.s32.totalorder 2, %s23
      // Predicated region
      $region81: #{tpu_custom_call.1} parent=5 // pred_check
        %p1130 = pneg %p1129
      $region82: #{tpu_custom_call.1} parent=5 // pred_check_branch
        %1132 = sbr.rel (%p1130) target = $region84
      $region83: #{tpu_custom_call.1} parent=5 // pred_region
        %s1133 = ssub.s32 %s23, 2
        // Predicated region
        $region85: #{tpu_custom_call.1} parent=83 // pred_check
          %p1134 = pneg %p330
        $region86: #{tpu_custom_call.1} parent=83 // pred_check_branch
          %1136 = sbr.rel (%p1134) target = $region88
        $region87: #{tpu_custom_call.1} parent=83 // pred_region
          %s1137 = sand.u32 %s315, 1
          %s1138 = scalar_lea.sflag [#allocation4], %s1137
          %s1139 = sand.u32 %s315, 1
          %s1140 = smul.addr %s1139, 8
          %s1141 = scalar_lea.vmem [#allocation5], %s1140
          %1142 = dma.done %s1138, 128
        $region88: #{tpu_custom_call.1} parent=83 // pred_fallthru
          _
      $region84: #{tpu_custom_call.1} parent=5 // pred_fallthru
        _
    $region6: #{tpu_custom_call.1} parent=1 // loop_footer
      %s27 = sadd.s32 1, %s23
    $region7: #{tpu_custom_call.1} parent=1 // loop_footer_branch
      %22 = sbr.rel target = $region3
    $region8: #{tpu_custom_call.1} parent=1 // loop_exit
      _
    %1143 = vsyncpa [#allocation3], 1
    %s1144 = scalar_lea.sflag [#allocation3], 1
    %1145 = vsyncpa %s1144, 1
    %1146 = vsyncpa [#allocation4], 1
    %s1147 = scalar_lea.sflag [#allocation4], 1
    %1148 = vsyncpa %s1147, 1

</llo_original>
